<compile_context>
chip_gen: v6e
topology: v6e:2x2x1
jax: 0.10.0
libtpu: 0.0.40
codegen_flags: <defaults>
</compile_context>

<pallas_src>
import functools
import math

import jax
import jax.numpy as jnp
from jax.experimental import pallas as pl
from jax.experimental.pallas import tpu as pltpu


def _vmem_limit_bytes():
    """Generation-aware scoped-VMEM budget (~75% of physical per-core VMEM)."""
    try:
        cap = pltpu.get_tpu_info().vmem_capacity_bytes
    except Exception:
        cap = 64 * 1024 * 1024          # conservative fallback (v7x-sized)
    return int(cap) * 3 // 4


_VMEM_LIMIT = _vmem_limit_bytes()


def _pick_tile(dim, target, align, min_blocks=1):
    """Largest multiple of `align` that divides `dim`, is <= target, and (if possible) leaves
    at least `min_blocks` blocks along the axis (so a 'parallel' grid axis can shard across
    v7x's two TensorCores)."""
    if dim <= align:
        return dim
    target = max(align, min(target, dim))
    best_any = None
    t = (target // align) * align
    while t >= align:
        if dim % t == 0:
            if best_any is None:
                best_any = t
            if dim // t >= min_blocks:
                return t
        t -= align
    if best_any is not None:
        return best_any
    # TODO(synk): oddly-sized dims fall back to a single full block; a production kernel
    # should pad / use a cdiv grid with a masked tail instead.
    return dim


# ----------------------------- per-row LayerNorm statistics -----------------------------

def _row_stats_kernel(x_ref, mu_ref, inv_ref, *, eps, d):
    x = x_ref[...]                                            # (tm, D) f32
    mean = jnp.mean(x, axis=-1, keepdims=True)
    diff = x - mean
    # torch.std default = unbiased (N-1) estimator; reference divides by (std + eps).
    var = jnp.sum(diff * diff, axis=-1, keepdims=True) * (1.0 / (d - 1))
    mu_ref[...] = mean
    inv_ref[...] = 1.0 / (jnp.sqrt(var) + eps)                # exact divide (bit-closer to torch)


def layernorm_row_stats(x2d, *, eps=1e-6, block_rows=512):
    """Returns (mean, 1/(std+eps)) per row, each (M, 1) float32."""
    M, D = x2d.shape
    tm = _pick_tile(M, block_rows, 8, min_blocks=2)
    return pl.pallas_call(
        functools.partial(_row_stats_kernel, eps=eps, d=D),
        out_shape=(jax.ShapeDtypeStruct((M, 1), jnp.float32),
                   jax.ShapeDtypeStruct((M, 1), jnp.float32)),
        grid=(M // tm,),
        in_specs=[pl.BlockSpec((tm, D), lambda i: (i, 0))],
        out_specs=(pl.BlockSpec((tm, 1), lambda i: (i, 0)),
                   pl.BlockSpec((tm, 1), lambda i: (i, 0))),
        compiler_params=pltpu.CompilerParams(
            dimension_semantics=("parallel",),
            vmem_limit_bytes=_VMEM_LIMIT),
    )(x2d)


# ----------------------------- standalone LayerNorm (generic path) -----------------------------

def _layernorm_kernel(x_ref, g_ref, b_ref, o_ref, *, eps, d):
    x = x_ref[...]                                            # (tm, D) f32
    mean = jnp.mean(x, axis=-1, keepdims=True)
    diff = x - mean
    var = jnp.sum(diff * diff, axis=-1, keepdims=True) * (1.0 / (d - 1))
    inv = 1.0 / (jnp.sqrt(var) + eps)
    o_ref[...] = (g_ref[...] * (diff * inv) + b_ref[...]).astype(o_ref.dtype)


def layernorm(x2d, gamma, beta, *, eps=1e-6, out_dtype=jnp.float32, block_rows=512):
    M, D = x2d.shape
    tm = _pick_tile(M, block_rows, 8, min_blocks=2)
    return pl.pallas_call(
        functools.partial(_layernorm_kernel, eps=eps, d=D),
        out_shape=jax.ShapeDtypeStruct((M, D), out_dtype),
        grid=(M // tm,),
        in_specs=[
            pl.BlockSpec((tm, D), lambda i: (i, 0)),
            pl.BlockSpec((1, D), lambda i: (0, 0)),
            pl.BlockSpec((1, D), lambda i: (0, 0)),
        ],
        out_specs=pl.BlockSpec((tm, D), lambda i: (i, 0)),
        compiler_params=pltpu.CompilerParams(
            dimension_semantics=("parallel",),
            vmem_limit_bytes=_VMEM_LIMIT),
    )(x2d, gamma.reshape(1, D), beta.reshape(1, D))


# ------------- fused LayerNorm + Linear sublayer + residual (single matmul kernel) -------------

def _ln_linear_residual_kernel(mu_ref, inv_ref, g_ref, be_ref,
                               x_ref, w_ref, bias_ref, r_ref, o_ref):
    k = pl.program_id(2)

    @pl.when(k == 0)
    def _():
        o_ref[...] = jnp.zeros_like(o_ref)

    # Normalize the LHS K-slice on the fly (f32 VALU) and cast to bf16 for the MXU.
    y = (x_ref[...] - mu_ref[...]) * inv_ref[...] * g_ref[...] + be_ref[...]
    o_ref[...] += jnp.dot(y.astype(jnp.bfloat16), w_ref[...],
                          preferred_element_type=jnp.float32)

    @pl.when(k == pl.num_programs(2) - 1)
    def _():
        # Bias + residual folded into the epilogue: single HBM pass for the output.
        o_ref[...] = o_ref[...] + bias_ref[...] + r_ref[...]


def fused_layernorm_linear_residual(x2d, w_bf16, bias, gamma, beta, *, eps=1e-6,
                                    block_m=256, block_n=256, block_k=512):
    """resid(x) + (LayerNorm(x) @ W + b), with LayerNorm fused into the matmul LHS load."""
    M, K = x2d.shape
    Kw, N = w_bf16.shape
    assert K == Kw
    mu, inv = layernorm_row_stats(x2d, eps=eps)

    tm = _pick_tile(M, block_m, 8, min_blocks=2)      # keep >=2 parallel M blocks for v7x
    tn = _pick_tile(N, block_n, 128)
    tk = _pick_tile(K, block_k, 128)
    # TODO(synk): if K gets large, sweep pipeline_mode=pl.Buffered(3) on the weight BlockSpec.
    return pl.pallas_call(
        _ln_linear_residual_kernel,
        out_shape=jax.ShapeDtypeStruct((M, N), x2d.dtype),
        grid=(M // tm, N // tn, K // tk),
        in_specs=[
            pl.BlockSpec((tm, 1), lambda i, j, k: (i, 0)),     # row mean
            pl.BlockSpec((tm, 1), lambda i, j, k: (i, 0)),     # row 1/(std+eps)
            pl.BlockSpec((1, tk), lambda i, j, k: (0, k)),     # gamma K-slice
            pl.BlockSpec((1, tk), lambda i, j, k: (0, k)),     # beta  K-slice
            pl.BlockSpec((tm, tk), lambda i, j, k: (i, k)),    # raw x (LHS)
            pl.BlockSpec((tk, tn), lambda i, j, k: (k, j)),    # weight (bf16)
            pl.BlockSpec((1, tn), lambda i, j, k: (0, j)),     # linear bias
            pl.BlockSpec((tm, tn), lambda i, j, k: (i, j)),    # residual (= x, N==K==D)
        ],
        out_specs=pl.BlockSpec((tm, tn), lambda i, j, k: (i, j)),
        compiler_params=pltpu.CompilerParams(
            dimension_semantics=("parallel", "parallel", "arbitrary"),
            vmem_limit_bytes=_VMEM_LIMIT),
    )(mu, inv, gamma.reshape(1, K), beta.reshape(1, K),
      x2d, w_bf16, bias.reshape(1, N), x2d)


# ----------------------------- SublayerConnection -----------------------------

def sublayer_connection(x, sublayer, gamma, beta, *, eps=1e-6):
    """Generic path: x + dropout(sublayer(LayerNorm(x))) for an arbitrary sublayer callable.

    Dropout is the identity (eval mode).  The residual add is left to XLA so it fuses into the
    sublayer's own epilogue (no extra HBM round trip).
    # TODO(synk): training-mode dropout would need a pltpu.prng_* mask; not implemented here.
    """
    B, S, D = x.shape
    x2d = x.reshape(B * S, D)
    y = layernorm(x2d, gamma, beta, eps=eps).reshape(B, S, D)
    return x + sublayer(y)


def sublayer_connection_linear(x, w, b, gamma, beta, *, eps=1e-6):
    """Fast path when the sublayer is Linear(D, D): LayerNorm, matmul, bias and residual all
    happen inside one matmul kernel (plus a tiny row-stats pass). Weights go to bf16 once in
    the wrapper; accumulation and output stay f32."""
    B, S, D = x.shape
    x2d = x.reshape(B * S, D)
    out2d = fused_layernorm_linear_residual(
        x2d, w.astype(jnp.bfloat16), b, gamma, beta, eps=eps)
    return out2d.reshape(B, S, D)


# ----------------------------- demo / check -----------------------------

def _layernorm_ref(x, gamma, beta, eps):
    mean = jnp.mean(x, axis=-1, keepdims=True)
    diff = x - mean
    std = jnp.sqrt(jnp.sum(diff * diff, axis=-1, keepdims=True) / (x.shape[-1] - 1))
    return gamma * diff / (std + eps) + beta


if __name__ == "__main__":
    B, S, D = 2, 64, 256          # M = B*S = 128 rows, hidden = 256 (lane-dense, tiles divide evenly)
    eps = 1e-6

    key = jax.random.PRNGKey(0)
    kx, kg, kb, kw, kbl = jax.random.split(key, 5)

    x = jax.random.normal(kx, (B, S, D), jnp.float32)
    gamma = 1.0 + 0.1 * jax.random.normal(kg, (D,), jnp.float32)
    beta = 0.1 * jax.random.normal(kb, (D,), jnp.float32)
    bound = 1.0 / math.sqrt(D)
    w = jax.random.uniform(kw, (D, D), jnp.float32, -bound, bound)
    b = jax.random.uniform(kbl, (D,), jnp.float32, -bound, bound)

    # 1) Fused path: sublayer = Linear(D, D); LayerNorm + matmul + bias + residual in one kernel.
    fused = jax.jit(functools.partial(sublayer_connection_linear, eps=eps))
    out_fused = fused(x, w, b, gamma, beta)
    jax.block_until_ready(out_fused)

    # 2) Generic path: arbitrary (black-box) sublayer callable.
    generic = jax.jit(lambda x_, g_, b_: sublayer_connection(x_, jnp.tanh, g_, b_, eps=eps))
    out_generic = generic(x, gamma, beta)
    jax.block_until_ready(out_generic)

    # Pure-JAX references (torch semantics: unbiased std, (std + eps) denominator).
    y_ref = _layernorm_ref(x, gamma, beta, eps)
    ref_fused = x + (y_ref @ w + b)
    ref_generic = x + jnp.tanh(y_ref)

    assert out_fused.shape == (B, S, D) and out_fused.dtype == jnp.float32
    assert out_generic.shape == (B, S, D) and out_generic.dtype == jnp.float32
    assert bool(jnp.all(jnp.isfinite(out_fused)))
    assert bool(jnp.all(jnp.isfinite(out_generic)))
    # Loose tolerance on the fused path (bf16 MXU inputs); tight on the f32 generic path.
    assert bool(jnp.allclose(out_fused, ref_fused, rtol=5e-2, atol=5e-2)), (
        float(jnp.max(jnp.abs(out_fused - ref_fused))))
    assert bool(jnp.allclose(out_generic, ref_generic, rtol=2e-3, atol=2e-3)), (
        float(jnp.max(jnp.abs(out_generic - ref_generic))))
    print("KERNEL_OK")
</pallas_src>

<mosaic_0001>
module attributes {stable_mosaic.version = 11 : i64} {
  func.func @_row_stats_kernel(%arg0: i32, %arg1: memref<64x256xf32, #tpu.memory_space<vmem>>, %arg2: memref<64x1xf32, #tpu.memory_space<vmem>>, %arg3: memref<64x1xf32, #tpu.memory_space<vmem>>) attributes {dimension_semantics = [#tpu.dimension_semantics<parallel>], iteration_bounds = array<i64: 2>, scalar_prefetch = 0 : i64, scratch_operands = 0 : i64, tpu.core_type = #tpu.core_type<tc>, window_params = [{transform_indices = @transform_0, window_bounds = array<i64: 64, 256>}, {transform_indices = @transform_1, window_bounds = array<i64: 64, 1>}, {transform_indices = @transform_2, window_bounds = array<i64: 64, 1>}]} {
    %c0 = arith.constant 0 : index
    %c0_0 = arith.constant 0 : index
    %0 = vector.load %arg1[%c0, %c0_0] : memref<64x256xf32, #tpu.memory_space<vmem>>, vector<64x256xf32>
    %cst = arith.constant dense<0.000000e+00> : vector<64xf32>
    %1 = vector.multi_reduction <add>, %0, %cst [1] : vector<64x256xf32> to vector<64xf32>
    %2 = vector.shape_cast %1 : vector<64xf32> to vector<64x1xf32>
    %cst_1 = arith.constant 2.560000e+02 : f32
    %3 = vector.broadcast %cst_1 : f32 to vector<64x1xf32>
    %4 = arith.divf %2, %3 : vector<64x1xf32>
    %5 = vector.broadcast %4 : vector<64x1xf32> to vector<64x256xf32>
    %6 = arith.subf %0, %5 : vector<64x256xf32>
    %7 = arith.mulf %6, %6 : vector<64x256xf32>
    %cst_2 = arith.constant dense<0.000000e+00> : vector<64xf32>
    %8 = vector.multi_reduction <add>, %7, %cst_2 [1] : vector<64x256xf32> to vector<64xf32>
    %9 = vector.shape_cast %8 : vector<64xf32> to vector<64x1xf32>
    %cst_3 = arith.constant 0.00392156886 : f32
    %10 = vector.broadcast %cst_3 : f32 to vector<64x1xf32>
    %11 = arith.mulf %9, %10 : vector<64x1xf32>
    %c0_4 = arith.constant 0 : index
    %c0_5 = arith.constant 0 : index
    %12 = vector.load %arg2[%c0_4, %c0_5] : memref<64x1xf32, #tpu.memory_space<vmem>>, vector<64x1xf32>
    tpu.vector_store %arg2[%c0_4, %c0_5], %4 {strides = array<i32>} : memref<64x1xf32, #tpu.memory_space<vmem>>, vector<64x1xf32>,
    %13 = math.sqrt %11 : vector<64x1xf32>
    %cst_6 = arith.constant 9.99999997E-7 : f32
    %14 = vector.broadcast %cst_6 : f32 to vector<64x1xf32>
    %15 = arith.addf %13, %14 : vector<64x1xf32>
    %cst_7 = arith.constant 1.000000e+00 : f32
    %16 = vector.broadcast %cst_7 : f32 to vector<64x1xf32>
    %17 = arith.divf %16, %15 : vector<64x1xf32>
    %c0_8 = arith.constant 0 : index
    %c0_9 = arith.constant 0 : index
    %18 = vector.load %arg3[%c0_8, %c0_9] : memref<64x1xf32, #tpu.memory_space<vmem>>, vector<64x1xf32>
    tpu.vector_store %arg3[%c0_8, %c0_9], %17 {strides = array<i32>} : memref<64x1xf32, #tpu.memory_space<vmem>>, vector<64x1xf32>,
    return
  }
  func.func @transform_0(%arg0: i32) -> (i32, i32) {
    %c0_i32 = arith.constant 0 : i32
    %c0_i32_0 = arith.constant 0 : i32
    return %arg0, %c0_i32 : i32, i32
  }
  func.func @transform_1(%arg0: i32) -> (i32, i32) {
    %c0_i32 = arith.constant 0 : i32
    %c0_i32_0 = arith.constant 0 : i32
    return %arg0, %c0_i32 : i32, i32
  }
  func.func @transform_2(%arg0: i32) -> (i32, i32) {
    %c0_i32 = arith.constant 0 : i32
    %c0_i32_0 = arith.constant 0 : i32
    return %arg0, %c0_i32 : i32, i32
  }
}

module attributes {stable_mosaic.version = 11 : i64} {
  func.func @_ln_linear_residual_kernel(%arg0: i32, %arg1: i32, %arg2: i32, %arg3: memref<64x1xf32, #tpu.memory_space<vmem>>, %arg4: memref<64x1xf32, #tpu.memory_space<vmem>>, %arg5: memref<1x256xf32, #tpu.memory_space<vmem>>, %arg6: memref<1x256xf32, #tpu.memory_space<vmem>>, %arg7: memref<64x256xf32, #tpu.memory_space<vmem>>, %arg8: memref<256x256xbf16, #tpu.memory_space<vmem>>, %arg9: memref<1x256xf32, #tpu.memory_space<vmem>>, %arg10: memref<64x256xf32, #tpu.memory_space<vmem>>, %arg11: memref<64x256xf32, #tpu.memory_space<vmem>>) attributes {dimension_semantics = [#tpu.dimension_semantics<parallel>, #tpu.dimension_semantics<parallel>, #tpu.dimension_semantics<arbitrary>], iteration_bounds = array<i64: 2, 1, 1>, scalar_prefetch = 0 : i64, scratch_operands = 0 : i64, tpu.core_type = #tpu.core_type<tc>, window_params = [{transform_indices = @transform_0, window_bounds = array<i64: 64, 1>}, {transform_indices = @transform_1, window_bounds = array<i64: 64, 1>}, {transform_indices = @transform_2, window_bounds = array<i64: 1, 256>}, {transform_indices = @transform_3, window_bounds = array<i64: 1, 256>}, {transform_indices = @transform_4, window_bounds = array<i64: 64, 256>}, {transform_indices = @transform_5, window_bounds = array<i64: 256, 256>}, {transform_indices = @transform_6, window_bounds = array<i64: 1, 256>}, {transform_indices = @transform_7, window_bounds = array<i64: 64, 256>}, {transform_indices = @transform_8, window_bounds = array<i64: 64, 256>}]} {
    %c0_i32 = arith.constant 0 : i32
    %0 = arith.cmpi eq, %arg2, %c0_i32 : i32
    %1 = arith.extui %0 : i1 to i32
    %c0_i32_0 = arith.constant 0 : i32
    %2 = arith.cmpi ne, %1, %c0_i32_0 : i32
    scf.if %2 {
      %cst_18 = arith.constant 0.000000e+00 : f32
      %25 = vector.broadcast %cst_18 : f32 to vector<64x256xf32>
      %c0_19 = arith.constant 0 : index
      %c0_20 = arith.constant 0 : index
      %26 = vector.load %arg11[%c0_19, %c0_20] : memref<64x256xf32, #tpu.memory_space<vmem>>, vector<64x256xf32>
      tpu.vector_store %arg11[%c0_19, %c0_20], %25 {strides = array<i32>} : memref<64x256xf32, #tpu.memory_space<vmem>>, vector<64x256xf32>,
    } else {
    }
    %c0 = arith.constant 0 : index
    %c0_1 = arith.constant 0 : index
    %3 = vector.load %arg7[%c0, %c0_1] : memref<64x256xf32, #tpu.memory_space<vmem>>, vector<64x256xf32>
    %c0_2 = arith.constant 0 : index
    %c0_3 = arith.constant 0 : index
    %4 = vector.load %arg3[%c0_2, %c0_3] : memref<64x1xf32, #tpu.memory_space<vmem>>, vector<64x1xf32>
    %5 = vector.broadcast %4 : vector<64x1xf32> to vector<64x256xf32>
    %6 = arith.subf %3, %5 : vector<64x256xf32>
    %c0_4 = arith.constant 0 : index
    %c0_5 = arith.constant 0 : index
    %7 = vector.load %arg4[%c0_4, %c0_5] : memref<64x1xf32, #tpu.memory_space<vmem>>, vector<64x1xf32>
    %8 = vector.broadcast %7 : vector<64x1xf32> to vector<64x256xf32>
    %9 = arith.mulf %6, %8 : vector<64x256xf32>
    %c0_6 = arith.constant 0 : index
    %c0_7 = arith.constant 0 : index
    %10 = vector.load %arg5[%c0_6, %c0_7] : memref<1x256xf32, #tpu.memory_space<vmem>>, vector<1x256xf32>
    %11 = vector.broadcast %10 : vector<1x256xf32> to vector<64x256xf32>
    %12 = arith.mulf %9, %11 : vector<64x256xf32>
    %c0_8 = arith.constant 0 : index
    %c0_9 = arith.constant 0 : index
    %13 = vector.load %arg6[%c0_8, %c0_9] : memref<1x256xf32, #tpu.memory_space<vmem>>, vector<1x256xf32>
    %14 = vector.broadcast %13 : vector<1x256xf32> to vector<64x256xf32>
    %15 = arith.addf %12, %14 : vector<64x256xf32>
    %c0_10 = arith.constant 0 : index
    %c0_11 = arith.constant 0 : index
    %16 = vector.load %arg11[%c0_10, %c0_11] : memref<64x256xf32, #tpu.memory_space<vmem>>, vector<64x256xf32>
    %17 = arith.truncf %15 : vector<64x256xf32> to vector<64x256xbf16>
    %c0_12 = arith.constant 0 : index
    %c0_13 = arith.constant 0 : index
    %18 = vector.load %arg8[%c0_12, %c0_13] : memref<256x256xbf16, #tpu.memory_space<vmem>>, vector<256x256xbf16>
    %cst = arith.constant dense<0.000000e+00> : vector<64x256xf32>
    %19 = tpu.matmul %17, %18, %cst {dimension_numbers = #tpu.dot_dimension_numbers<[1], [0], [0], [1], [0, 0, 1, 1], [], []>} : vector<64x256xbf16>, vector<256x256xbf16>, vector<64x256xf32> -> vector<64x256xf32>
    %20 = arith.addf %16, %19 : vector<64x256xf32>
    %c0_14 = arith.constant 0 : index
    %c0_15 = arith.constant 0 : index
    %21 = vector.load %arg11[%c0_14, %c0_15] : memref<64x256xf32, #tpu.memory_space<vmem>>, vector<64x256xf32>
    tpu.vector_store %arg11[%c0_14, %c0_15], %20 {strides = array<i32>} : memref<64x256xf32, #tpu.memory_space<vmem>>, vector<64x256xf32>,
    %c0_i32_16 = arith.constant 0 : i32
    %22 = arith.cmpi eq, %arg2, %c0_i32_16 : i32
    %23 = arith.extui %22 : i1 to i32
    %c0_i32_17 = arith.constant 0 : i32
    %24 = arith.cmpi ne, %23, %c0_i32_17 : i32
    scf.if %24 {
      %c0_18 = arith.constant 0 : index
      %c0_19 = arith.constant 0 : index
      %25 = vector.load %arg11[%c0_18, %c0_19] : memref<64x256xf32, #tpu.memory_space<vmem>>, vector<64x256xf32>
      %c0_20 = arith.constant 0 : index
      %c0_21 = arith.constant 0 : index
      %26 = vector.load %arg9[%c0_20, %c0_21] : memref<1x256xf32, #tpu.memory_space<vmem>>, vector<1x256xf32>
      %27 = vector.broadcast %26 : vector<1x256xf32> to vector<64x256xf32>
      %28 = arith.addf %25, %27 : vector<64x256xf32>
      %c0_22 = arith.constant 0 : index
      %c0_23 = arith.constant 0 : index
      %29 = vector.load %arg10[%c0_22, %c0_23] : memref<64x256xf32, #tpu.memory_space<vmem>>, vector<64x256xf32>
      %30 = arith.addf %28, %29 : vector<64x256xf32>
      %c0_24 = arith.constant 0 : index
      %c0_25 = arith.constant 0 : index
      %31 = vector.load %arg11[%c0_24, %c0_25] : memref<64x256xf32, #tpu.memory_space<vmem>>, vector<64x256xf32>
      tpu.vector_store %arg11[%c0_24, %c0_25], %30 {strides = array<i32>} : memref<64x256xf32, #tpu.memory_space<vmem>>, vector<64x256xf32>,
    } else {
    }
    return
  }
  func.func @transform_0(%arg0: i32, %arg1: i32, %arg2: i32) -> (i32, i32) {
    %c0_i32 = arith.constant 0 : i32
    %c0_i32_0 = arith.constant 0 : i32
    return %arg0, %c0_i32 : i32, i32
  }
  func.func @transform_1(%arg0: i32, %arg1: i32, %arg2: i32) -> (i32, i32) {
    %c0_i32 = arith.constant 0 : i32
    %c0_i32_0 = arith.constant 0 : i32
    return %arg0, %c0_i32 : i32, i32
  }
  func.func @transform_2(%arg0: i32, %arg1: i32, %arg2: i32) -> (i32, i32) {
    %c0_i32 = arith.constant 0 : i32
    %c0_i32_0 = arith.constant 0 : i32
    return %c0_i32, %arg2 : i32, i32
  }
  func.func @transform_3(%arg0: i32, %arg1: i32, %arg2: i32) -> (i32, i32) {
    %c0_i32 = arith.constant 0 : i32
    %c0_i32_0 = arith.constant 0 : i32
    return %c0_i32, %arg2 : i32, i32
  }
  func.func @transform_4(%arg0: i32, %arg1: i32, %arg2: i32) -> (i32, i32) {
    %c0_i32 = arith.constant 0 : i32
    return %arg0, %arg2 : i32, i32
  }
  func.func @transform_5(%arg0: i32, %arg1: i32, %arg2: i32) -> (i32, i32) {
    %c0_i32 = arith.constant 0 : i32
    return %arg2, %arg1 : i32, i32
  }
  func.func @transform_6(%arg0: i32, %arg1: i32, %arg2: i32) -> (i32, i32) {
    %c0_i32 = arith.constant 0 : i32
    %c0_i32_0 = arith.constant 0 : i32
    return %c0_i32, %arg1 : i32, i32
  }
  func.func @transform_7(%arg0: i32, %arg1: i32, %arg2: i32) -> (i32, i32) {
    %c0_i32 = arith.constant 0 : i32
    return %arg0, %arg1 : i32, i32
  }
  func.func @transform_8(%arg0: i32, %arg1: i32, %arg2: i32) -> (i32, i32) {
    %c0_i32 = arith.constant 0 : i32
    return %arg0, %arg1 : i32, i32
  }
}

</mosaic_0001>

<llo_original>
// kernel: sublayer_connection_linear.2
$region0: #{sublayer_connection_linear.2}
  #allocation0 [shape = 'u32[]', space=smem, size = 0x4, offset = 0x4, fixed_abs, tag = 'smem constant byte address 0x4 - core index']
  #allocation1 [shape = 'u32[144,128]{1,0:T(1,128)}', space=vmem, size = 0x12000, scoped, tag = 'internal scratch']
  %s0 = inlined_call_operand.vmem [shape: f32[128,256], index: 0, kind: input, shape index: {}]
  %s1 = inlined_call_operand.vmem [shape: f32[128,1], index: 1, kind: output, shape index: {0}]
  %s2 = inlined_call_operand.vmem [shape: f32[128,1], index: 2, kind: output, shape index: {1}]
  %3 = xla_tuple %s1, %s2
  %s4 = sld [smem:[#allocation0]]
  $region45: #{sublayer_connection_linear.2} parent=0
    _
  %s6 = ssub.s32 1, %s4
  %s7 = scalar_select 0, %s6, %s4
  loop: start=0, step=1, limit=4
  $region2: #{sublayer_connection_linear.2} parent=0 // loop_pre_header
    _
  $region3: #{sublayer_connection_linear.2} parent=0 // loop_header
    %s9 = sphi 0, %s13
    %p10 = scmp.ge.s32.totalorder %s9, 4
    %s19 = sphi 0, %s21
    %s22 = sphi 0, %s19
    %s23 = sphi 0, %s22
    %s39 = sphi 0, %s23
    %s45 = sphi 0, %s47
    %s48 = sphi 0, %s45
    %s49 = sphi 0, %s48
    %s65 = sphi 0, %s49
    %s71 = sphi 0, %s73
    %s74 = sphi 0, %s71
    %s75 = sphi 0, %s74
    %s91 = sphi 0, %s75
  $region4: #{sublayer_connection_linear.2} parent=0 // loop_header_branch
    %12 = sbr.rel (%p10) target = $region8
  $region5: #{sublayer_connection_linear.2} parent=0 // loop_body
    %s14 = ssub.s32 %s9, 1
    %s15 = ssub.s32 %s9, 2
    %s16 = sadd.s32 %s9, 1
    %s17 = ssub.s32 %s9, %s16
    %p18 = scmp.eq.s32.totalorder %s17, 0
    %s20 = sadd.s32 %s19, 1
    %s21 = scalar_select %p18, %s19, %s20
    %p24 = pneg %p18
    %p25 = scmp.eq.s32.totalorder %s9, 1
    %p26 = por %p24, %p25
    %p27 = scmp.ne.s32.totalorder %s19, %s22
    %p28 = scmp.eq.s32.totalorder %s9, 0
    %p29 = por %p27, %p28
    %p30 = scmp.ne.s32.totalorder %s19, %s22
    %p31 = scmp.eq.s32.totalorder %s14, 1
    %p32 = por %p30, %p31
    %p33 = scmp.ne.s32.totalorder %s22, %s23
    %p34 = scmp.eq.s32.totalorder %s14, 0
    %p35 = por %p33, %p34
    %p36 = scmp.ne.s32.totalorder %s22, %s23
    %p37 = scmp.eq.s32.totalorder %s15, 1
    %p38 = por %p36, %p37
    %p40 = scmp.ne.s32.totalorder %s23, %s39
    %p41 = scmp.eq.s32.totalorder %s15, 0
    %p42 = por %p40, %p41
    %s43 = ssub.s32 %s9, %s16
    %p44 = scmp.eq.s32.totalorder %s43, 0
    %s46 = sadd.s32 %s45, 1
    %s47 = scalar_select %p44, %s45, %s46
    %p50 = pneg %p44
    %p51 = scmp.eq.s32.totalorder %s9, 1
    %p52 = por %p50, %p51
    %p53 = scmp.ne.s32.totalorder %s45, %s48
    %p54 = scmp.eq.s32.totalorder %s9, 0
    %p55 = por %p53, %p54
    %p56 = scmp.ne.s32.totalorder %s45, %s48
    %p57 = scmp.eq.s32.totalorder %s14, 1
    %p58 = por %p56, %p57
    %p59 = scmp.ne.s32.totalorder %s48, %s49
    %p60 = scmp.eq.s32.totalorder %s14, 0
    %p61 = por %p59, %p60
    %p62 = scmp.ne.s32.totalorder %s48, %s49
    %p63 = scmp.eq.s32.totalorder %s15, 1
    %p64 = por %p62, %p63
    %p66 = scmp.ne.s32.totalorder %s49, %s65
    %p67 = scmp.eq.s32.totalorder %s15, 0
    %p68 = por %p66, %p67
    %s69 = ssub.s32 %s9, %s16
    %p70 = scmp.eq.s32.totalorder %s69, 0
    %s72 = sadd.s32 %s71, 1
    %s73 = scalar_select %p70, %s71, %s72
    %p76 = pneg %p70
    %p77 = scmp.eq.s32.totalorder %s9, 1
    %p78 = por %p76, %p77
    %p79 = scmp.ne.s32.totalorder %s71, %s74
    %p80 = scmp.eq.s32.totalorder %s9, 0
    %p81 = por %p79, %p80
    %p82 = scmp.ne.s32.totalorder %s71, %s74
    %p83 = scmp.eq.s32.totalorder %s14, 1
    %p84 = por %p82, %p83
    %p85 = scmp.ne.s32.totalorder %s74, %s75
    %p86 = scmp.eq.s32.totalorder %s14, 0
    %p87 = por %p85, %p86
    %p88 = scmp.ne.s32.totalorder %s74, %s75
    %p89 = scmp.eq.s32.totalorder %s15, 1
    %p90 = por %p88, %p89
    %p92 = scmp.ne.s32.totalorder %s75, %s91
    %p93 = scmp.eq.s32.totalorder %s15, 0
    %p94 = por %p92, %p93
    %p95 = scmp.le.s32.totalorder 1, %s9
    %p96 = scmp.lt.s32.totalorder %s9, 3
    %p97 = pnand %p95, %p96
    %p98 = pneg %p97
    // Predicated region
    $region9: #{sublayer_connection_linear.2} parent=5 // pred_check
      _
    $region10: #{sublayer_connection_linear.2} parent=5 // pred_check_branch
      %100 = sbr.rel (%p97) target = $region12
    $region11: #{sublayer_connection_linear.2} parent=5 // pred_region
      %s101 = ssub.s32 %s9, 1
    $region12: #{sublayer_connection_linear.2} parent=5 // pred_fallthru
      _
    %p102 = scmp.lt.s32.totalorder %s9, 2
    // Predicated region
    $region13: #{sublayer_connection_linear.2} parent=5 // pred_check
      %p103 = pneg %p102
    $region14: #{sublayer_connection_linear.2} parent=5 // pred_check_branch
      %105 = sbr.rel (%p103) target = $region16
    $region15: #{sublayer_connection_linear.2} parent=5 // pred_region
      // Predicated region
      $region17: #{sublayer_connection_linear.2} parent=15 // pred_check
        %p106 = pneg %p29
      $region18: #{sublayer_connection_linear.2} parent=15 // pred_check_branch
        %108 = sbr.rel (%p106) target = $region20
      $region19: #{sublayer_connection_linear.2} parent=15 // pred_region
        %s109 = smul.u32 8, %s9
        %p110 = scmp.lt.s32.totalorder %s109, 15
        %s111 = scalar_select %p110, %s109, 15
        %s112 = smul.addr %s111, 2
        %s113 = smul.addr %s112, 8
        %s114 = scalar_lea.vmem %s0, %s113
        %s115 = smul.u32 8, %s9
      $region20: #{sublayer_connection_linear.2} parent=15 // pred_fallthru
        _
    $region16: #{sublayer_connection_linear.2} parent=5 // pred_fallthru
      _
    %p116 = scmp.le.s32.totalorder 1, %s9
    %p117 = scmp.lt.s32.totalorder %s9, 3
    %p118 = pnand %p116, %p117
    %p119 = pneg %p118
    // Predicated region
    $region21: #{sublayer_connection_linear.2} parent=5 // pred_check
      _
    $region22: #{sublayer_connection_linear.2} parent=5 // pred_check_branch
      %121 = sbr.rel (%p118) target = $region24
    $region23: #{sublayer_connection_linear.2} parent=5 // pred_region
      %s122 = ssub.s32 %s9, 1
      %s123 = smul.u32 8, %s14
      %p124 = scmp.lt.s32.totalorder %s123, 15
      %s125 = scalar_select %p124, %s123, 15
      %s126 = smul.addr %s125, 2
      %s127 = smul.addr %s126, 8
      %s128 = scalar_lea.vmem %s0, %s127
      %p129 = pneg %p35
      %p130 = pneg %p32
      %p131 = pneg %p61
      %p132 = pneg %p58
      %s133 = smul.u32 8, %s14
      %p134 = scmp.lt.s32.totalorder %s133, 15
      %s135 = scalar_select %p134, %s133, 15
      %s136 = smul.addr %s135, 8
      %s137 = scalar_lea.vmem %s1, %s136
      %p138 = pneg %p87
      %p139 = pneg %p84
      %s140 = smul.u32 8, %s14
      %p141 = scmp.lt.s32.totalorder %s140, 15
      %s142 = scalar_select %p141, %s140, 15
      %s143 = smul.addr %s142, 8
      %s144 = scalar_lea.vmem %s2, %s143
      %s145 = smul.u32 8, %s14
      %p146 = scmp.lt.s32.totalorder %s145, 15
      %s147 = scalar_select %p146, %s145, 15
      %s148 = smul.addr %s147, 2
      %s149 = smul.addr %s148, 8
      %s150 = scalar_lea.vmem %s0, %s149
      %s151 = smul.u32 8, %s14
      %s152 = smul.u32 8, %s14
      %p153 = scmp.lt.s32.totalorder %s152, 15
      %s154 = scalar_select %p153, %s152, 15
      %s155 = smul.addr %s154, 8
      %s156 = scalar_lea.vmem %s1, %s155
      %s157 = smul.u32 8, %s14
      %s158 = smul.u32 8, %s14
      %p159 = scmp.lt.s32.totalorder %s158, 15
      %s160 = scalar_select %p159, %s158, 15
      %s161 = smul.addr %s160, 8
      %s162 = scalar_lea.vmem %s2, %s161
      %s163 = smul.u32 8, %s14
      %v164 = vld [vmem:[%s150] sm:$0xff]
      %v165 = vld [vmem:[%s150 + $0x8] sm:$0xff]
      %v166 = vld [vmem:[%s150 + $0x10] sm:$0xff]
      %v167 = vld [vmem:[%s150 + $0x18] sm:$0xff]
      %v168 = vld [vmem:[%s150 + $0x20] sm:$0xff]
      %v169 = vld [vmem:[%s150 + $0x28] sm:$0xff]
      %v170 = vld [vmem:[%s150 + $0x30] sm:$0xff]
      %v171 = vld [vmem:[%s150 + $0x38] sm:$0xff]
      %v172 = vld [vmem:[%s150 + $0x40] sm:$0xff]
      %v173 = vld [vmem:[%s150 + $0x48] sm:$0xff]
      %v174 = vld [vmem:[%s150 + $0x50] sm:$0xff]
      %v175 = vld [vmem:[%s150 + $0x58] sm:$0xff]
      %v176 = vld [vmem:[%s150 + $0x60] sm:$0xff]
      %v177 = vld [vmem:[%s150 + $0x68] sm:$0xff]
      %v178 = vld [vmem:[%s150 + $0x70] sm:$0xff]
      %v179 = vld [vmem:[%s150 + $0x78] sm:$0xff]
      %v180 = vadd.f32 %v164, %v165
      %181 = vadd.xlane.f32.xlu0 %v180
      %v182 = vpop.xlane.xlu0 %181
      %v183 = vadd.f32 %v166, %v167
      %184 = vadd.xlane.f32.xlu0 %v183
      %v185 = vpop.xlane.xlu0 %184
      %v186 = vadd.f32 %v168, %v169
      %187 = vadd.xlane.f32.xlu0 %v186
      %v188 = vpop.xlane.xlu0 %187
      %v189 = vadd.f32 %v170, %v171
      %190 = vadd.xlane.f32.xlu0 %v189
      %v191 = vpop.xlane.xlu0 %190
      %v192 = vadd.f32 %v172, %v173
      %193 = vadd.xlane.f32.xlu0 %v192
      %v194 = vpop.xlane.xlu0 %193
      %v195 = vadd.f32 %v174, %v175
      %196 = vadd.xlane.f32.xlu0 %v195
      %v197 = vpop.xlane.xlu0 %196
      %v198 = vadd.f32 %v176, %v177
      %199 = vadd.xlane.f32.xlu0 %v198
      %v200 = vpop.xlane.xlu0 %199
      %v201 = vadd.f32 %v178, %v179
      %202 = vadd.xlane.f32.xlu0 %v201
      %v203 = vpop.xlane.xlu0 %202
      %v204 = vrcp.pop 256.0
      %v205 = vmul.f32 %v182, %v204
      %v206 = vmul.f32 %v185, %v204
      %v207 = vmul.f32 %v188, %v204
      %v208 = vmul.f32 %v191, %v204
      %v209 = vmul.f32 %v194, %v204
      %v210 = vmul.f32 %v197, %v204
      %v211 = vmul.f32 %v200, %v204
      %v212 = vmul.f32 %v203, %v204
      %v213 = vsub.f32 %v164, %v205
      %v214 = vsub.f32 %v165, %v205
      %v215 = vsub.f32 %v166, %v206
      %v216 = vsub.f32 %v167, %v206
      %v217 = vsub.f32 %v168, %v207
      %v218 = vsub.f32 %v169, %v207
      %v219 = vsub.f32 %v170, %v208
      %v220 = vsub.f32 %v171, %v208
      %v221 = vsub.f32 %v172, %v209
      %v222 = vsub.f32 %v173, %v209
      %v223 = vsub.f32 %v174, %v210
      %v224 = vsub.f32 %v175, %v210
      %v225 = vsub.f32 %v176, %v211
      %v226 = vsub.f32 %v177, %v211
      %v227 = vsub.f32 %v178, %v212
      %v228 = vsub.f32 %v179, %v212
      %v229 = vmul.f32 %v213, %v213
      %v230 = vmul.f32 %v214, %v214
      %v231 = vmul.f32 %v215, %v215
      %v232 = vmul.f32 %v216, %v216
      %v233 = vmul.f32 %v217, %v217
      %v234 = vmul.f32 %v218, %v218
      %v235 = vmul.f32 %v219, %v219
      %v236 = vmul.f32 %v220, %v220
      %v237 = vmul.f32 %v221, %v221
      %v238 = vmul.f32 %v222, %v222
      %v239 = vmul.f32 %v223, %v223
      %v240 = vmul.f32 %v224, %v224
      %v241 = vmul.f32 %v225, %v225
      %v242 = vmul.f32 %v226, %v226
      %v243 = vmul.f32 %v227, %v227
      %v244 = vmul.f32 %v228, %v228
      %v245 = vadd.f32 %v229, %v230
      %246 = vadd.xlane.f32.xlu0 %v245
      %v247 = vpop.xlane.xlu0 %246
      %v248 = vadd.f32 %v231, %v232
      %249 = vadd.xlane.f32.xlu0 %v248
      %v250 = vpop.xlane.xlu0 %249
      %v251 = vadd.f32 %v233, %v234
      %252 = vadd.xlane.f32.xlu0 %v251
      %v253 = vpop.xlane.xlu0 %252
      %v254 = vadd.f32 %v235, %v236
      %255 = vadd.xlane.f32.xlu0 %v254
      %v256 = vpop.xlane.xlu0 %255
      %v257 = vadd.f32 %v237, %v238
      %258 = vadd.xlane.f32.xlu0 %v257
      %v259 = vpop.xlane.xlu0 %258
      %v260 = vadd.f32 %v239, %v240
      %261 = vadd.xlane.f32.xlu0 %v260
      %v262 = vpop.xlane.xlu0 %261
      %v263 = vadd.f32 %v241, %v242
      %264 = vadd.xlane.f32.xlu0 %v263
      %v265 = vpop.xlane.xlu0 %264
      %v266 = vadd.f32 %v243, %v244
      %267 = vadd.xlane.f32.xlu0 %v266
      %v268 = vpop.xlane.xlu0 %267
      %v269 = vmul.f32 %v247, 0.003921569
      %v270 = vmul.f32 %v250, 0.003921569
      %v271 = vmul.f32 %v253, 0.003921569
      %v272 = vmul.f32 %v256, 0.003921569
      %v273 = vmul.f32 %v259, 0.003921569
      %v274 = vmul.f32 %v262, 0.003921569
      %v275 = vmul.f32 %v265, 0.003921569
      %v276 = vmul.f32 %v268, 0.003921569
      %vm277 = vcmask 7168
      %278 = vst.msk [vmem:[%s156] sm:$0xff] %vm277, %v205
      %279 = vst.msk [vmem:[%s156 + $0x8] sm:$0xff] %vm277, %v206
      %280 = vst.msk [vmem:[%s156 + $0x10] sm:$0xff] %vm277, %v207
      %281 = vst.msk [vmem:[%s156 + $0x18] sm:$0xff] %vm277, %v208
      %282 = vst.msk [vmem:[%s156 + $0x20] sm:$0xff] %vm277, %v209
      %283 = vst.msk [vmem:[%s156 + $0x28] sm:$0xff] %vm277, %v210
      %284 = vst.msk [vmem:[%s156 + $0x30] sm:$0xff] %vm277, %v211
      %285 = vst.msk [vmem:[%s156 + $0x38] sm:$0xff] %vm277, %v212
      %v286 = vrsqrt.pop %v269
      %v287 = vmul.f32 %v269, %v286
      %vm288 = vcmp.eq.f32.partialorder %v269, inf
      %v289 = vsel %vm288, %v269, %v287
      %vm290 = vcmp.eq.f32.partialorder %v269, 0.0
      %v291 = vand.u32 %v269, 2147483648
      %v292 = vsel %vm290, %v291, %v289
      %v293 = vrsqrt.pop %v270
      %v294 = vmul.f32 %v270, %v293
      %vm295 = vcmp.eq.f32.partialorder %v270, inf
      %v296 = vsel %vm295, %v270, %v294
      %vm297 = vcmp.eq.f32.partialorder %v270, 0.0
      %v298 = vand.u32 %v270, 2147483648
      %v299 = vsel %vm297, %v298, %v296
      %v300 = vrsqrt.pop %v271
      %v301 = vmul.f32 %v271, %v300
      %vm302 = vcmp.eq.f32.partialorder %v271, inf
      %v303 = vsel %vm302, %v271, %v301
      %vm304 = vcmp.eq.f32.partialorder %v271, 0.0
      %v305 = vand.u32 %v271, 2147483648
      %v306 = vsel %vm304, %v305, %v303
      %v307 = vrsqrt.pop %v272
      %v308 = vmul.f32 %v272, %v307
      %vm309 = vcmp.eq.f32.partialorder %v272, inf
      %v310 = vsel %vm309, %v272, %v308
      %vm311 = vcmp.eq.f32.partialorder %v272, 0.0
      %v312 = vand.u32 %v272, 2147483648
      %v313 = vsel %vm311, %v312, %v310
      %v314 = vrsqrt.pop %v273
      %v315 = vmul.f32 %v273, %v314
      %vm316 = vcmp.eq.f32.partialorder %v273, inf
      %v317 = vsel %vm316, %v273, %v315
      %vm318 = vcmp.eq.f32.partialorder %v273, 0.0
      %v319 = vand.u32 %v273, 2147483648
      %v320 = vsel %vm318, %v319, %v317
      %v321 = vrsqrt.pop %v274
      %v322 = vmul.f32 %v274, %v321
      %vm323 = vcmp.eq.f32.partialorder %v274, inf
      %v324 = vsel %vm323, %v274, %v322
      %vm325 = vcmp.eq.f32.partialorder %v274, 0.0
      %v326 = vand.u32 %v274, 2147483648
      %v327 = vsel %vm325, %v326, %v324
      %v328 = vrsqrt.pop %v275
      %v329 = vmul.f32 %v275, %v328
      %vm330 = vcmp.eq.f32.partialorder %v275, inf
      %v331 = vsel %vm330, %v275, %v329
      %vm332 = vcmp.eq.f32.partialorder %v275, 0.0
      %v333 = vand.u32 %v275, 2147483648
      %v334 = vsel %vm332, %v333, %v331
      %v335 = vrsqrt.pop %v276
      %v336 = vmul.f32 %v276, %v335
      %vm337 = vcmp.eq.f32.partialorder %v276, inf
      %v338 = vsel %vm337, %v276, %v336
      %vm339 = vcmp.eq.f32.partialorder %v276, 0.0
      %v340 = vand.u32 %v276, 2147483648
      %v341 = vsel %vm339, %v340, %v338
      %v342 = vadd.f32 %v292, 1e-06
      %v343 = vadd.f32 %v299, 1e-06
      %v344 = vadd.f32 %v306, 1e-06
      %v345 = vadd.f32 %v313, 1e-06
      %v346 = vadd.f32 %v320, 1e-06
      %v347 = vadd.f32 %v327, 1e-06
      %v348 = vadd.f32 %v334, 1e-06
      %v349 = vadd.f32 %v341, 1e-06
      %v350 = vrcp.pop %v342
      %v351 = vmul.f32 1.0, %v350
      %v352 = vrcp.pop %v343
      %v353 = vmul.f32 1.0, %v352
      %v354 = vrcp.pop %v344
      %v355 = vmul.f32 1.0, %v354
      %v356 = vrcp.pop %v345
      %v357 = vmul.f32 1.0, %v356
      %v358 = vrcp.pop %v346
      %v359 = vmul.f32 1.0, %v358
      %v360 = vrcp.pop %v347
      %v361 = vmul.f32 1.0, %v360
      %v362 = vrcp.pop %v348
      %v363 = vmul.f32 1.0, %v362
      %v364 = vrcp.pop %v349
      %v365 = vmul.f32 1.0, %v364
      %366 = vst.msk [vmem:[%s162] sm:$0xff] %vm277, %v351
      %367 = vst.msk [vmem:[%s162 + $0x8] sm:$0xff] %vm277, %v353
      %368 = vst.msk [vmem:[%s162 + $0x10] sm:$0xff] %vm277, %v355
      %369 = vst.msk [vmem:[%s162 + $0x18] sm:$0xff] %vm277, %v357
      %370 = vst.msk [vmem:[%s162 + $0x20] sm:$0xff] %vm277, %v359
      %371 = vst.msk [vmem:[%s162 + $0x28] sm:$0xff] %vm277, %v361
      %372 = vst.msk [vmem:[%s162 + $0x30] sm:$0xff] %vm277, %v363
      %373 = vst.msk [vmem:[%s162 + $0x38] sm:$0xff] %vm277, %v365
      %s374 = smul.u32 8, %s14
      %p375 = scmp.lt.s32.totalorder %s374, 15
      %s376 = scalar_select %p375, %s374, 15
      %s377 = smul.addr %s376, 8
      %s378 = scalar_lea.vmem %s1, %s377
      %s379 = smul.u32 8, %s14
      %p380 = scmp.lt.s32.totalorder %s379, 15
      %s381 = scalar_select %p380, %s379, 15
      %s382 = smul.addr %s381, 8
      %s383 = scalar_lea.vmem %s2, %s382
      // Predicated region
      $region25: #{sublayer_connection_linear.2} parent=23 // pred_check
        %p384 = pneg %p58
      $region26: #{sublayer_connection_linear.2} parent=23 // pred_check_branch
        %386 = sbr.rel (%p384) target = $region28
      $region27: #{sublayer_connection_linear.2} parent=23 // pred_region
        %s387 = smul.u32 8, %s14
      $region28: #{sublayer_connection_linear.2} parent=23 // pred_fallthru
        _
      // Predicated region
      $region29: #{sublayer_connection_linear.2} parent=23 // pred_check
        %p388 = pneg %p84
      $region30: #{sublayer_connection_linear.2} parent=23 // pred_check_branch
        %390 = sbr.rel (%p388) target = $region32
      $region31: #{sublayer_connection_linear.2} parent=23 // pred_region
        %s391 = smul.u32 8, %s14
      $region32: #{sublayer_connection_linear.2} parent=23 // pred_fallthru
        _
    $region24: #{sublayer_connection_linear.2} parent=5 // pred_fallthru
      _
    %p392 = scmp.le.s32.totalorder 2, %s9
    // Predicated region
    $region33: #{sublayer_connection_linear.2} parent=5 // pred_check
      %p393 = pneg %p392
    $region34: #{sublayer_connection_linear.2} parent=5 // pred_check_branch
      %395 = sbr.rel (%p393) target = $region36
    $region35: #{sublayer_connection_linear.2} parent=5 // pred_region
      %s396 = ssub.s32 %s9, 2
      // Predicated region
      $region37: #{sublayer_connection_linear.2} parent=35 // pred_check
        %p397 = pneg %p64
      $region38: #{sublayer_connection_linear.2} parent=35 // pred_check_branch
        %399 = sbr.rel (%p397) target = $region40
      $region39: #{sublayer_connection_linear.2} parent=35 // pred_region
        %s400 = smul.u32 8, %s15
        %p401 = scmp.lt.s32.totalorder %s400, 15
        %s402 = scalar_select %p401, %s400, 15
        %s403 = smul.addr %s402, 8
        %s404 = scalar_lea.vmem %s1, %s403
      $region40: #{sublayer_connection_linear.2} parent=35 // pred_fallthru
        _
      // Predicated region
      $region41: #{sublayer_connection_linear.2} parent=35 // pred_check
        %p405 = pneg %p90
      $region42: #{sublayer_connection_linear.2} parent=35 // pred_check_branch
        %407 = sbr.rel (%p405) target = $region44
      $region43: #{sublayer_connection_linear.2} parent=35 // pred_region
        %s408 = smul.u32 8, %s15
        %p409 = scmp.lt.s32.totalorder %s408, 15
        %s410 = scalar_select %p409, %s408, 15
        %s411 = smul.addr %s410, 8
        %s412 = scalar_lea.vmem %s2, %s411
      $region44: #{sublayer_connection_linear.2} parent=35 // pred_fallthru
        _
    $region36: #{sublayer_connection_linear.2} parent=5 // pred_fallthru
      _
  $region6: #{sublayer_connection_linear.2} parent=0 // loop_footer
    %s13 = sadd.s32 1, %s9
  $region7: #{sublayer_connection_linear.2} parent=0 // loop_footer_branch
    %8 = sbr.rel target = $region3
  $region8: #{sublayer_connection_linear.2} parent=0 // loop_exit
    _

// kernel: sublayer_connection_linear.3
$region0: #{sublayer_connection_linear.3}
  #allocation0 [shape = 'u32[]', space=smem, size = 0x4, offset = 0x4, fixed_abs, tag = 'smem constant byte address 0x4 - core index']
  #allocation1 [shape = 'u32[144,128]{1,0:T(1,128)}', space=vmem, size = 0x12000, scoped, tag = 'internal scratch']
  %s0 = inlined_call_operand.vmem [shape: f32[128,1], index: 0, kind: input, shape index: {}]
  %s1 = inlined_call_operand.vmem [shape: f32[128,1], index: 1, kind: input, shape index: {}]
  %s2 = inlined_call_operand.vmem [shape: f32[1,256], index: 2, kind: input, shape index: {}]
  %s3 = inlined_call_operand.vmem [shape: f32[1,256], index: 3, kind: input, shape index: {}]
  %s4 = inlined_call_operand.vmem [shape: f32[128,256], index: 4, kind: input, shape index: {}, may-alias: {4,7}]
  %s5 = inlined_call_operand.vmem [shape: bf16[256,256], index: 5, kind: input, shape index: {}]
  %s6 = inlined_call_operand.vmem [shape: f32[1,256], index: 6, kind: input, shape index: {}]
  %s7 = inlined_call_operand.vmem [shape: f32[128,256], index: 7, kind: input, shape index: {}, may-alias: {4,7}]
  %s8 = inlined_call_operand.hbm [shape: f32[128,256], index: 8, kind: output, shape index: {}]
  %s9 = sld [smem:[#allocation0]]
  $region73: #{sublayer_connection_linear.3} parent=0
    _
  %s11 = ssub.s32 1, %s9
  %s12 = scalar_select 0, %s11, %s9
  $region1: #{sublayer_connection_linear.3} parent=0
    #allocation2 [shape = 'u8[131072]{0}', space=vmem, size = 0x20000, scoped, tag = 'output window, operand 0']
    #allocation3 [shape = 's32[2]{0}', space=sflag, size = 0x8, scoped, tag = 'scoped memory for sublayer_connection_linear.3']
    %13 = vsyncpa [#allocation3], 0
    %s14 = scalar_lea.sflag [#allocation3], 1
    %15 = vsyncpa %s14, 0
    loop: start=0, step=1, limit=4
    $region2: #{sublayer_connection_linear.3} parent=1 // loop_pre_header
      _
    $region3: #{sublayer_connection_linear.3} parent=1 // loop_header
      %s17 = sphi 0, %s21
      %p18 = scmp.ge.s32.totalorder %s17, 4
      %s24 = sphi 0, %s43
      %s25 = sphi 0, %s39
      %s26 = sphi 0, %s35
      %s27 = sphi 0, %s24
      %s28 = sphi 0, %s25
      %s29 = sphi 0, %s26
      %s30 = sphi 0, %s27
      %s31 = sphi 0, %s28
      %s32 = sphi 0, %s29
      %s46 = sphi 0, %s48
      %s49 = sphi 0, %s46
      %s50 = sphi 0, %s49
      %s66 = sphi 0, %s50
      %s72 = sphi 0, %s74
      %s75 = sphi 0, %s72
      %s76 = sphi 0, %s75
      %s92 = sphi 0, %s76
      %s98 = sphi 0, %s100
      %s101 = sphi 0, %s98
      %s102 = sphi 0, %s101
      %s118 = sphi 0, %s102
      %s124 = sphi 0, %s126
      %s127 = sphi 0, %s124
      %s128 = sphi 0, %s127
      %s144 = sphi 0, %s128
      %s152 = sphi 0, %s154
      %s155 = sphi 0, %s152
      %s156 = sphi 0, %s155
      %s172 = sphi 0, %s156
      %s180 = sphi 0, %s182
      %s183 = sphi 0, %s180
      %s184 = sphi 0, %s183
      %s200 = sphi 0, %s184
      %s206 = sphi 0, %s208
      %s209 = sphi 0, %s206
      %s210 = sphi 0, %s209
      %s226 = sphi 0, %s210
      %s234 = sphi 0, %s236
      %s237 = sphi 0, %s234
      %s238 = sphi 0, %s237
      %s254 = sphi 0, %s238
      %s262 = sphi 0, %s264
      %s265 = sphi 0, %s262
      %s266 = sphi 0, %s265
      %s282 = sphi 0, %s266
    $region4: #{sublayer_connection_linear.3} parent=1 // loop_header_branch
      %20 = sbr.rel (%p18) target = $region8
    $region5: #{sublayer_connection_linear.3} parent=1 // loop_body
      %s22 = ssub.s32 %s17, 1
      %s23 = ssub.s32 %s17, 2
      %s33 = sadd.s32 1, %s26
      %p34 = scmp.ge.s32.totalorder %s33, 1
      %s35 = scalar_select %p34, 0, %s33
      %s36 = sadd.s32 1, %s25
      %s37 = scalar_select %p34, %s36, %s25
      %p38 = scmp.ge.s32.totalorder %s37, 1
      %s39 = scalar_select %p38, 0, %s37
      %s40 = sadd.s32 1, %s24
      %s41 = scalar_select %p38, %s40, %s24
      %p42 = scmp.ge.s32.totalorder %s41, 2
      %s43 = scalar_select %p42, 0, %s41
      %s44 = ssub.s32 %s24, %s43
      %p45 = scmp.eq.s32.totalorder %s44, 0
      %s47 = sadd.s32 %s46, 1
      %s48 = scalar_select %p45, %s46, %s47
      %p51 = pneg %p45
      %p52 = scmp.eq.s32.totalorder %s17, 1
      %p53 = por %p51, %p52
      %p54 = scmp.ne.s32.totalorder %s46, %s49
      %p55 = scmp.eq.s32.totalorder %s17, 0
      %p56 = por %p54, %p55
      %p57 = scmp.ne.s32.totalorder %s46, %s49
      %p58 = scmp.eq.s32.totalorder %s22, 1
      %p59 = por %p57, %p58
      %p60 = scmp.ne.s32.totalorder %s49, %s50
      %p61 = scmp.eq.s32.totalorder %s22, 0
      %p62 = por %p60, %p61
      %p63 = scmp.ne.s32.totalorder %s49, %s50
      %p64 = scmp.eq.s32.totalorder %s23, 1
      %p65 = por %p63, %p64
      %p67 = scmp.ne.s32.totalorder %s50, %s66
      %p68 = scmp.eq.s32.totalorder %s23, 0
      %p69 = por %p67, %p68
      %s70 = ssub.s32 %s24, %s43
      %p71 = scmp.eq.s32.totalorder %s70, 0
      %s73 = sadd.s32 %s72, 1
      %s74 = scalar_select %p71, %s72, %s73
      %p77 = pneg %p71
      %p78 = scmp.eq.s32.totalorder %s17, 1
      %p79 = por %p77, %p78
      %p80 = scmp.ne.s32.totalorder %s72, %s75
      %p81 = scmp.eq.s32.totalorder %s17, 0
      %p82 = por %p80, %p81
      %p83 = scmp.ne.s32.totalorder %s72, %s75
      %p84 = scmp.eq.s32.totalorder %s22, 1
      %p85 = por %p83, %p84
      %p86 = scmp.ne.s32.totalorder %s75, %s76
      %p87 = scmp.eq.s32.totalorder %s22, 0
      %p88 = por %p86, %p87
      %p89 = scmp.ne.s32.totalorder %s75, %s76
      %p90 = scmp.eq.s32.totalorder %s23, 1
      %p91 = por %p89, %p90
      %p93 = scmp.ne.s32.totalorder %s76, %s92
      %p94 = scmp.eq.s32.totalorder %s23, 0
      %p95 = por %p93, %p94
      %s96 = ssub.s32 %s26, %s35
      %p97 = scmp.eq.s32.totalorder %s96, 0
      %s99 = sadd.s32 %s98, 1
      %s100 = scalar_select %p97, %s98, %s99
      %p103 = pneg %p97
      %p104 = scmp.eq.s32.totalorder %s17, 1
      %p105 = por %p103, %p104
      %p106 = scmp.ne.s32.totalorder %s98, %s101
      %p107 = scmp.eq.s32.totalorder %s17, 0
      %p108 = por %p106, %p107
      %p109 = scmp.ne.s32.totalorder %s98, %s101
      %p110 = scmp.eq.s32.totalorder %s22, 1
      %p111 = por %p109, %p110
      %p112 = scmp.ne.s32.totalorder %s101, %s102
      %p113 = scmp.eq.s32.totalorder %s22, 0
      %p114 = por %p112, %p113
      %p115 = scmp.ne.s32.totalorder %s101, %s102
      %p116 = scmp.eq.s32.totalorder %s23, 1
      %p117 = por %p115, %p116
      %p119 = scmp.ne.s32.totalorder %s102, %s118
      %p120 = scmp.eq.s32.totalorder %s23, 0
      %p121 = por %p119, %p120
      %s122 = ssub.s32 %s26, %s35
      %p123 = scmp.eq.s32.totalorder %s122, 0
      %s125 = sadd.s32 %s124, 1
      %s126 = scalar_select %p123, %s124, %s125
      %p129 = pneg %p123
      %p130 = scmp.eq.s32.totalorder %s17, 1
      %p131 = por %p129, %p130
      %p132 = scmp.ne.s32.totalorder %s124, %s127
      %p133 = scmp.eq.s32.totalorder %s17, 0
      %p134 = por %p132, %p133
      %p135 = scmp.ne.s32.totalorder %s124, %s127
      %p136 = scmp.eq.s32.totalorder %s22, 1
      %p137 = por %p135, %p136
      %p138 = scmp.ne.s32.totalorder %s127, %s128
      %p139 = scmp.eq.s32.totalorder %s22, 0
      %p140 = por %p138, %p139
      %p141 = scmp.ne.s32.totalorder %s127, %s128
      %p142 = scmp.eq.s32.totalorder %s23, 1
      %p143 = por %p141, %p142
      %p145 = scmp.ne.s32.totalorder %s128, %s144
      %p146 = scmp.eq.s32.totalorder %s23, 0
      %p147 = por %p145, %p146
      %s148 = ssub.s32 %s24, %s43
      %s149 = ssub.s32 %s26, %s35
      %s150 = sor.u32 %s148, %s149
      %p151 = scmp.eq.s32.totalorder %s150, 0
      %s153 = sadd.s32 %s152, 1
      %s154 = scalar_select %p151, %s152, %s153
      %p157 = pneg %p151
      %p158 = scmp.eq.s32.totalorder %s17, 1
      %p159 = por %p157, %p158
      %p160 = scmp.ne.s32.totalorder %s152, %s155
      %p161 = scmp.eq.s32.totalorder %s17, 0
      %p162 = por %p160, %p161
      %p163 = scmp.ne.s32.totalorder %s152, %s155
      %p164 = scmp.eq.s32.totalorder %s22, 1
      %p165 = por %p163, %p164
      %p166 = scmp.ne.s32.totalorder %s155, %s156
      %p167 = scmp.eq.s32.totalorder %s22, 0
      %p168 = por %p166, %p167
      %p169 = scmp.ne.s32.totalorder %s155, %s156
      %p170 = scmp.eq.s32.totalorder %s23, 1
      %p171 = por %p169, %p170
      %p173 = scmp.ne.s32.totalorder %s156, %s172
      %p174 = scmp.eq.s32.totalorder %s23, 0
      %p175 = por %p173, %p174
      %s176 = ssub.s32 %s26, %s35
      %s177 = ssub.s32 %s25, %s39
      %s178 = sor.u32 %s176, %s177
      %p179 = scmp.eq.s32.totalorder %s178, 0
      %s181 = sadd.s32 %s180, 1
      %s182 = scalar_select %p179, %s180, %s181
      %p185 = pneg %p179
      %p186 = scmp.eq.s32.totalorder %s17, 1
      %p187 = por %p185, %p186
      %p188 = scmp.ne.s32.totalorder %s180, %s183
      %p189 = scmp.eq.s32.totalorder %s17, 0
      %p190 = por %p188, %p189
      %p191 = scmp.ne.s32.totalorder %s180, %s183
      %p192 = scmp.eq.s32.totalorder %s22, 1
      %p193 = por %p191, %p192
      %p194 = scmp.ne.s32.totalorder %s183, %s184
      %p195 = scmp.eq.s32.totalorder %s22, 0
      %p196 = por %p194, %p195
      %p197 = scmp.ne.s32.totalorder %s183, %s184
      %p198 = scmp.eq.s32.totalorder %s23, 1
      %p199 = por %p197, %p198
      %p201 = scmp.ne.s32.totalorder %s184, %s200
      %p202 = scmp.eq.s32.totalorder %s23, 0
      %p203 = por %p201, %p202
      %s204 = ssub.s32 %s25, %s39
      %p205 = scmp.eq.s32.totalorder %s204, 0
      %s207 = sadd.s32 %s206, 1
      %s208 = scalar_select %p205, %s206, %s207
      %p211 = pneg %p205
      %p212 = scmp.eq.s32.totalorder %s17, 1
      %p213 = por %p211, %p212
      %p214 = scmp.ne.s32.totalorder %s206, %s209
      %p215 = scmp.eq.s32.totalorder %s17, 0
      %p216 = por %p214, %p215
      %p217 = scmp.ne.s32.totalorder %s206, %s209
      %p218 = scmp.eq.s32.totalorder %s22, 1
      %p219 = por %p217, %p218
      %p220 = scmp.ne.s32.totalorder %s209, %s210
      %p221 = scmp.eq.s32.totalorder %s22, 0
      %p222 = por %p220, %p221
      %p223 = scmp.ne.s32.totalorder %s209, %s210
      %p224 = scmp.eq.s32.totalorder %s23, 1
      %p225 = por %p223, %p224
      %p227 = scmp.ne.s32.totalorder %s210, %s226
      %p228 = scmp.eq.s32.totalorder %s23, 0
      %p229 = por %p227, %p228
      %s230 = ssub.s32 %s24, %s43
      %s231 = ssub.s32 %s25, %s39
      %s232 = sor.u32 %s230, %s231
      %p233 = scmp.eq.s32.totalorder %s232, 0
      %s235 = sadd.s32 %s234, 1
      %s236 = scalar_select %p233, %s234, %s235
      %p239 = pneg %p233
      %p240 = scmp.eq.s32.totalorder %s17, 1
      %p241 = por %p239, %p240
      %p242 = scmp.ne.s32.totalorder %s234, %s237
      %p243 = scmp.eq.s32.totalorder %s17, 0
      %p244 = por %p242, %p243
      %p245 = scmp.ne.s32.totalorder %s234, %s237
      %p246 = scmp.eq.s32.totalorder %s22, 1
      %p247 = por %p245, %p246
      %p248 = scmp.ne.s32.totalorder %s237, %s238
      %p249 = scmp.eq.s32.totalorder %s22, 0
      %p250 = por %p248, %p249
      %p251 = scmp.ne.s32.totalorder %s237, %s238
      %p252 = scmp.eq.s32.totalorder %s23, 1
      %p253 = por %p251, %p252
      %p255 = scmp.ne.s32.totalorder %s238, %s254
      %p256 = scmp.eq.s32.totalorder %s23, 0
      %p257 = por %p255, %p256
      %s258 = ssub.s32 %s24, %s43
      %s259 = ssub.s32 %s25, %s39
      %s260 = sor.u32 %s258, %s259
      %p261 = scmp.eq.s32.totalorder %s260, 0
      %s263 = sadd.s32 %s262, 1
      %s264 = scalar_select %p261, %s262, %s263
      %p267 = pneg %p261
      %p268 = scmp.eq.s32.totalorder %s17, 1
      %p269 = por %p267, %p268
      %p270 = scmp.ne.s32.totalorder %s262, %s265
      %p271 = scmp.eq.s32.totalorder %s17, 0
      %p272 = por %p270, %p271
      %p273 = scmp.ne.s32.totalorder %s262, %s265
      %p274 = scmp.eq.s32.totalorder %s22, 1
      %p275 = por %p273, %p274
      %p276 = scmp.ne.s32.totalorder %s265, %s266
      %p277 = scmp.eq.s32.totalorder %s22, 0
      %p278 = por %p276, %p277
      %p279 = scmp.ne.s32.totalorder %s265, %s266
      %p280 = scmp.eq.s32.totalorder %s23, 1
      %p281 = por %p279, %p280
      %p283 = scmp.ne.s32.totalorder %s266, %s282
      %p284 = scmp.eq.s32.totalorder %s23, 0
      %p285 = por %p283, %p284
      %p286 = scmp.le.s32.totalorder 1, %s17
      %p287 = scmp.lt.s32.totalorder %s17, 3
      %p288 = pnand %p286, %p287
      %p289 = pneg %p288
      // Predicated region
      $region9: #{sublayer_connection_linear.3} parent=5 // pred_check
        _
      $region10: #{sublayer_connection_linear.3} parent=5 // pred_check_branch
        %291 = sbr.rel (%p288) target = $region12
      $region11: #{sublayer_connection_linear.3} parent=5 // pred_region
        %s292 = ssub.s32 %s17, 1
        // Predicated region
        $region13: #{sublayer_connection_linear.3} parent=11 // pred_check
          %p293 = pneg %p114
        $region14: #{sublayer_connection_linear.3} parent=11 // pred_check_branch
          %295 = sbr.rel (%p293) target = $region16
        $region15: #{sublayer_connection_linear.3} parent=11 // pred_region
          %s296 = smul.u32 2, %s29
          %p297 = scmp.lt.s32.totalorder %s296, 1
          %s298 = scalar_select %p297, %s296, 1
          %s299 = scalar_lea.vmem %s2, %s298
          %s300 = smul.u32 2, %s29
        $region16: #{sublayer_connection_linear.3} parent=11 // pred_fallthru
          _
        // Predicated region
        $region17: #{sublayer_connection_linear.3} parent=11 // pred_check
          %p301 = pneg %p140
        $region18: #{sublayer_connection_linear.3} parent=11 // pred_check_branch
          %303 = sbr.rel (%p301) target = $region20
        $region19: #{sublayer_connection_linear.3} parent=11 // pred_region
          %s304 = smul.u32 2, %s29
          %p305 = scmp.lt.s32.totalorder %s304, 1
          %s306 = scalar_select %p305, %s304, 1
          %s307 = scalar_lea.vmem %s3, %s306
          %s308 = smul.u32 2, %s29
        $region20: #{sublayer_connection_linear.3} parent=11 // pred_fallthru
          _
        // Predicated region
        $region21: #{sublayer_connection_linear.3} parent=11 // pred_check
          %p309 = pneg %p196
        $region22: #{sublayer_connection_linear.3} parent=11 // pred_check_branch
          %311 = sbr.rel (%p309) target = $region24
        $region23: #{sublayer_connection_linear.3} parent=11 // pred_region
          %s312 = smul.u32 32, %s29
          %s313 = smul.u32 2, %s28
          %p314 = scmp.lt.s32.totalorder %s312, 31
          %s315 = scalar_select %p314, %s312, 31
          %p316 = scmp.lt.s32.totalorder %s313, 1
          %s317 = scalar_select %p316, %s313, 1
          %s318 = smul.addr %s315, 2
          %s319 = sadd.s32 %s317, %s318
          %s320 = smul.addr %s319, 4
          %s321 = scalar_lea.vmem %s5, %s320
          %s322 = smul.u32 32, %s29
          %s323 = smul.u32 2, %s28
        $region24: #{sublayer_connection_linear.3} parent=11 // pred_fallthru
          _
        // Predicated region
        $region25: #{sublayer_connection_linear.3} parent=11 // pred_check
          %p324 = pneg %p222
        $region26: #{sublayer_connection_linear.3} parent=11 // pred_check_branch
          %326 = sbr.rel (%p324) target = $region28
        $region27: #{sublayer_connection_linear.3} parent=11 // pred_region
          %s327 = smul.u32 2, %s28
          %p328 = scmp.lt.s32.totalorder %s327, 1
          %s329 = scalar_select %p328, %s327, 1
          %s330 = scalar_lea.vmem %s6, %s329
          %s331 = smul.u32 2, %s28
        $region28: #{sublayer_connection_linear.3} parent=11 // pred_fallthru
          _
      $region12: #{sublayer_connection_linear.3} parent=5 // pred_fallthru
        _
      %p332 = scmp.lt.s32.totalorder %s17, 2
      // Predicated region
      $region29: #{sublayer_connection_linear.3} parent=5 // pred_check
        %p333 = pneg %p332
      $region30: #{sublayer_connection_linear.3} parent=5 // pred_check_branch
        %335 = sbr.rel (%p333) target = $region32
      $region31: #{sublayer_connection_linear.3} parent=5 // pred_region
        // Predicated region
        $region33: #{sublayer_connection_linear.3} parent=31 // pred_check
          %p336 = pneg %p56
        $region34: #{sublayer_connection_linear.3} parent=31 // pred_check_branch
          %338 = sbr.rel (%p336) target = $region36
        $region35: #{sublayer_connection_linear.3} parent=31 // pred_region
          %s339 = smul.u32 8, %s24
          %p340 = scmp.lt.s32.totalorder %s339, 15
          %s341 = scalar_select %p340, %s339, 15
          %s342 = smul.addr %s341, 8
          %s343 = scalar_lea.vmem %s0, %s342
          %s344 = smul.u32 8, %s24
        $region36: #{sublayer_connection_linear.3} parent=31 // pred_fallthru
          _
        // Predicated region
        $region37: #{sublayer_connection_linear.3} parent=31 // pred_check
          %p345 = pneg %p82
        $region38: #{sublayer_connection_linear.3} parent=31 // pred_check_branch
          %347 = sbr.rel (%p345) target = $region40
        $region39: #{sublayer_connection_linear.3} parent=31 // pred_region
          %s348 = smul.u32 8, %s24
          %p349 = scmp.lt.s32.totalorder %s348, 15
          %s350 = scalar_select %p349, %s348, 15
          %s351 = smul.addr %s350, 8
          %s352 = scalar_lea.vmem %s1, %s351
          %s353 = smul.u32 8, %s24
        $region40: #{sublayer_connection_linear.3} parent=31 // pred_fallthru
          _
        // Predicated region
        $region41: #{sublayer_connection_linear.3} parent=31 // pred_check
          %p354 = pneg %p162
        $region42: #{sublayer_connection_linear.3} parent=31 // pred_check_branch
          %356 = sbr.rel (%p354) target = $region44
        $region43: #{sublayer_connection_linear.3} parent=31 // pred_region
          %s357 = smul.u32 8, %s24
          %s358 = smul.u32 2, %s26
          %p359 = scmp.lt.s32.totalorder %s357, 15
          %s360 = scalar_select %p359, %s357, 15
          %p361 = scmp.lt.s32.totalorder %s358, 1
          %s362 = scalar_select %p361, %s358, 1
          %s363 = smul.addr %s360, 2
          %s364 = sadd.s32 %s362, %s363
          %s365 = smul.addr %s364, 8
          %s366 = scalar_lea.vmem %s4, %s365
          %s367 = smul.u32 8, %s24
          %s368 = smul.u32 2, %s26
        $region44: #{sublayer_connection_linear.3} parent=31 // pred_fallthru
          _
        // Predicated region
        $region45: #{sublayer_connection_linear.3} parent=31 // pred_check
          %p369 = pneg %p244
        $region46: #{sublayer_connection_linear.3} parent=31 // pred_check_branch
          %371 = sbr.rel (%p369) target = $region48
        $region47: #{sublayer_connection_linear.3} parent=31 // pred_region
          %s372 = smul.u32 8, %s24
          %s373 = smul.u32 2, %s25
          %p374 = scmp.lt.s32.totalorder %s372, 15
          %s375 = scalar_select %p374, %s372, 15
          %p376 = scmp.lt.s32.totalorder %s373, 1
          %s377 = scalar_select %p376, %s373, 1
          %s378 = smul.addr %s375, 2
          %s379 = sadd.s32 %s377, %s378
          %s380 = smul.addr %s379, 8
          %s381 = scalar_lea.vmem %s7, %s380
          %s382 = smul.u32 8, %s24
          %s383 = smul.u32 2, %s25
        $region48: #{sublayer_connection_linear.3} parent=31 // pred_fallthru
          _
      $region32: #{sublayer_connection_linear.3} parent=5 // pred_fallthru
        _
      %p384 = scmp.le.s32.totalorder 1, %s17
      %p385 = scmp.lt.s32.totalorder %s17, 3
      %p386 = pnand %p384, %p385
      %p387 = pneg %p386
      // Predicated region
      $region49: #{sublayer_connection_linear.3} parent=5 // pred_check
        _
      $region50: #{sublayer_connection_linear.3} parent=5 // pred_check_branch
        %389 = sbr.rel (%p386) target = $region52
      $region51: #{sublayer_connection_linear.3} parent=5 // pred_region
        %s390 = ssub.s32 %s17, 1
        %s391 = smul.u32 8, %s27
        %p392 = scmp.lt.s32.totalorder %s391, 15
        %s393 = scalar_select %p392, %s391, 15
        %s394 = smul.addr %s393, 8
        %s395 = scalar_lea.vmem %s0, %s394
        %p396 = pneg %p62
        %p397 = pneg %p59
        %s398 = smul.u32 8, %s27
        %p399 = scmp.lt.s32.totalorder %s398, 15
        %s400 = scalar_select %p399, %s398, 15
        %s401 = smul.addr %s400, 8
        %s402 = scalar_lea.vmem %s1, %s401
        %p403 = pneg %p88
        %p404 = pneg %p85
        %s405 = smul.u32 2, %s29
        %p406 = scmp.lt.s32.totalorder %s405, 1
        %s407 = scalar_select %p406, %s405, 1
        %s408 = scalar_lea.vmem %s2, %s407
        %p409 = pneg %p114
        %p410 = pneg %p111
        %s411 = smul.u32 2, %s29
        %p412 = scmp.lt.s32.totalorder %s411, 1
        %s413 = scalar_select %p412, %s411, 1
        %s414 = scalar_lea.vmem %s3, %s413
        %p415 = pneg %p140
        %p416 = pneg %p137
        %s417 = smul.u32 8, %s27
        %s418 = smul.u32 2, %s29
        %p419 = scmp.lt.s32.totalorder %s417, 15
        %s420 = scalar_select %p419, %s417, 15
        %p421 = scmp.lt.s32.totalorder %s418, 1
        %s422 = scalar_select %p421, %s418, 1
        %s423 = smul.addr %s420, 2
        %s424 = sadd.s32 %s422, %s423
        %s425 = smul.addr %s424, 8
        %s426 = scalar_lea.vmem %s4, %s425
        %p427 = pneg %p168
        %p428 = pneg %p165
        %s429 = smul.u32 32, %s29
        %s430 = smul.u32 2, %s28
        %p431 = scmp.lt.s32.totalorder %s429, 31
        %s432 = scalar_select %p431, %s429, 31
        %p433 = scmp.lt.s32.totalorder %s430, 1
        %s434 = scalar_select %p433, %s430, 1
        %s435 = smul.addr %s432, 2
        %s436 = sadd.s32 %s434, %s435
        %s437 = smul.addr %s436, 4
        %s438 = scalar_lea.vmem %s5, %s437
        %p439 = pneg %p196
        %p440 = pneg %p193
        %s441 = smul.u32 2, %s28
        %p442 = scmp.lt.s32.totalorder %s441, 1
        %s443 = scalar_select %p442, %s441, 1
        %s444 = scalar_lea.vmem %s6, %s443
        %p445 = pneg %p222
        %p446 = pneg %p219
        %s447 = smul.u32 8, %s27
        %s448 = smul.u32 2, %s28
        %p449 = scmp.lt.s32.totalorder %s447, 15
        %s450 = scalar_select %p449, %s447, 15
        %p451 = scmp.lt.s32.totalorder %s448, 1
        %s452 = scalar_select %p451, %s448, 1
        %s453 = smul.addr %s450, 2
        %s454 = sadd.s32 %s452, %s453
        %s455 = smul.addr %s454, 8
        %s456 = scalar_lea.vmem %s7, %s455
        %p457 = pneg %p250
        %p458 = pneg %p247
        %p459 = pneg %p278
        %p460 = pneg %p275
        %s461 = sand.u32 %s265, 1
        %s462 = scalar_lea.sflag [#allocation3], %s461
        %s463 = sand.u32 %s265, 1
        %s464 = smul.addr %s463, 128
        %s465 = scalar_lea.vmem [#allocation2], %s464
        %s466 = smul.u32 8, %s27
        %p467 = scmp.lt.s32.totalorder %s466, 15
        %s468 = scalar_select %p467, %s466, 15
        %s469 = smul.addr %s468, 8
        %s470 = scalar_lea.vmem %s0, %s469
        %s471 = smul.u32 8, %s27
        %s472 = smul.u32 8, %s27
        %p473 = scmp.lt.s32.totalorder %s472, 15
        %s474 = scalar_select %p473, %s472, 15
        %s475 = smul.addr %s474, 8
        %s476 = scalar_lea.vmem %s1, %s475
        %s477 = smul.u32 8, %s27
        %s478 = smul.u32 2, %s29
        %p479 = scmp.lt.s32.totalorder %s478, 1
        %s480 = scalar_select %p479, %s478, 1
        %s481 = scalar_lea.vmem %s2, %s480
        %s482 = smul.u32 2, %s29
        %s483 = smul.u32 2, %s29
        %p484 = scmp.lt.s32.totalorder %s483, 1
        %s485 = scalar_select %p484, %s483, 1
        %s486 = scalar_lea.vmem %s3, %s485
        %s487 = smul.u32 2, %s29
        %s488 = smul.u32 8, %s27
        %s489 = smul.u32 2, %s29
        %p490 = scmp.lt.s32.totalorder %s488, 15
        %s491 = scalar_select %p490, %s488, 15
        %p492 = scmp.lt.s32.totalorder %s489, 1
        %s493 = scalar_select %p492, %s489, 1
        %s494 = smul.addr %s491, 2
        %s495 = sadd.s32 %s493, %s494
        %s496 = smul.addr %s495, 8
        %s497 = scalar_lea.vmem %s4, %s496
        %s498 = smul.u32 8, %s27
        %s499 = smul.u32 2, %s29
        %s500 = smul.u32 32, %s29
        %s501 = smul.u32 2, %s28
        %p502 = scmp.lt.s32.totalorder %s500, 31
        %s503 = scalar_select %p502, %s500, 31
        %p504 = scmp.lt.s32.totalorder %s501, 1
        %s505 = scalar_select %p504, %s501, 1
        %s506 = smul.addr %s503, 2
        %s507 = sadd.s32 %s505, %s506
        %s508 = smul.addr %s507, 4
        %s509 = scalar_lea.vmem %s5, %s508
        %s510 = smul.u32 32, %s29
        %s511 = smul.u32 2, %s28
        %s512 = smul.u32 2, %s28
        %p513 = scmp.lt.s32.totalorder %s512, 1
        %s514 = scalar_select %p513, %s512, 1
        %s515 = scalar_lea.vmem %s6, %s514
        %s516 = smul.u32 2, %s28
        %s517 = smul.u32 8, %s27
        %s518 = smul.u32 2, %s28
        %p519 = scmp.lt.s32.totalorder %s517, 15
        %s520 = scalar_select %p519, %s517, 15
        %p521 = scmp.lt.s32.totalorder %s518, 1
        %s522 = scalar_select %p521, %s518, 1
        %s523 = smul.addr %s520, 2
        %s524 = sadd.s32 %s522, %s523
        %s525 = smul.addr %s524, 8
        %s526 = scalar_lea.vmem %s7, %s525
        %s527 = smul.u32 8, %s27
        %s528 = smul.u32 2, %s28
        %s529 = smul.u32 8, %s27
        %s530 = smul.u32 2, %s28
        %p531 = scmp.eq.s32.totalorder %s29, 0
        // Predicated region
        $region53: #{sublayer_connection_linear.3} parent=51 // pred_check
          %p532 = pneg %p531
        $region54: #{sublayer_connection_linear.3} parent=51 // pred_check_branch
          %534 = sbr.rel (%p532) target = $region56
        $region55: #{sublayer_connection_linear.3} parent=51 // pred_region
          %535 = vst [vmem:[%s465] sm:$0xff] 0.0
          %536 = vst [vmem:[%s465 + $0x8] sm:$0xff] 0.0
          %537 = vst [vmem:[%s465 + $0x10] sm:$0xff] 0.0
          %538 = vst [vmem:[%s465 + $0x18] sm:$0xff] 0.0
          %539 = vst [vmem:[%s465 + $0x20] sm:$0xff] 0.0
          %540 = vst [vmem:[%s465 + $0x28] sm:$0xff] 0.0
          %541 = vst [vmem:[%s465 + $0x30] sm:$0xff] 0.0
          %542 = vst [vmem:[%s465 + $0x38] sm:$0xff] 0.0
          %543 = vst [vmem:[%s465 + $0x40] sm:$0xff] 0.0
          %544 = vst [vmem:[%s465 + $0x48] sm:$0xff] 0.0
          %545 = vst [vmem:[%s465 + $0x50] sm:$0xff] 0.0
          %546 = vst [vmem:[%s465 + $0x58] sm:$0xff] 0.0
          %547 = vst [vmem:[%s465 + $0x60] sm:$0xff] 0.0
          %548 = vst [vmem:[%s465 + $0x68] sm:$0xff] 0.0
          %549 = vst [vmem:[%s465 + $0x70] sm:$0xff] 0.0
          %550 = vst [vmem:[%s465 + $0x78] sm:$0xff] 0.0
        $region56: #{sublayer_connection_linear.3} parent=51 // pred_fallthru
          _
        %v551 = vld [vmem:[%s497] sm:$0xff]
        %v552 = vld [vmem:[%s497 + $0x8] sm:$0xff]
        %v553 = vld [vmem:[%s497 + $0x10] sm:$0xff]
        %v554 = vld [vmem:[%s497 + $0x18] sm:$0xff]
        %v555 = vld [vmem:[%s497 + $0x20] sm:$0xff]
        %v556 = vld [vmem:[%s497 + $0x28] sm:$0xff]
        %v557 = vld [vmem:[%s497 + $0x30] sm:$0xff]
        %v558 = vld [vmem:[%s497 + $0x38] sm:$0xff]
        %v559 = vld [vmem:[%s497 + $0x40] sm:$0xff]
        %v560 = vld [vmem:[%s497 + $0x48] sm:$0xff]
        %v561 = vld [vmem:[%s497 + $0x50] sm:$0xff]
        %v562 = vld [vmem:[%s497 + $0x58] sm:$0xff]
        %v563 = vld [vmem:[%s497 + $0x60] sm:$0xff]
        %v564 = vld [vmem:[%s497 + $0x68] sm:$0xff]
        %v565 = vld [vmem:[%s497 + $0x70] sm:$0xff]
        %v566 = vld [vmem:[%s497 + $0x78] sm:$0xff]
        %v567 = vld [vmem:[%s470] sm:$0xff]
        %v568 = vld [vmem:[%s470 + $0x8] sm:$0xff]
        %v569 = vld [vmem:[%s470 + $0x10] sm:$0xff]
        %v570 = vld [vmem:[%s470 + $0x18] sm:$0xff]
        %v571 = vld [vmem:[%s470 + $0x20] sm:$0xff]
        %v572 = vld [vmem:[%s470 + $0x28] sm:$0xff]
        %v573 = vld [vmem:[%s470 + $0x30] sm:$0xff]
        %v574 = vld [vmem:[%s470 + $0x38] sm:$0xff]
        %576 = vset.pattern.permute.xlu0 0
        %577 = vperm.xlu0 %576, %v567
        %v578 = vpop.permute.xlu0 %577
        %581 = vset.pattern.permute.xlu0 0
        %582 = vperm.xlu0 %581, %v568
        %v583 = vpop.permute.xlu0 %582
        %586 = vset.pattern.permute.xlu0 0
        %587 = vperm.xlu0 %586, %v569
        %v588 = vpop.permute.xlu0 %587
        %591 = vset.pattern.permute.xlu0 0
        %592 = vperm.xlu0 %591, %v570
        %v593 = vpop.permute.xlu0 %592
        %596 = vset.pattern.permute.xlu0 0
        %597 = vperm.xlu0 %596, %v571
        %v598 = vpop.permute.xlu0 %597
        %601 = vset.pattern.permute.xlu0 0
        %602 = vperm.xlu0 %601, %v572
        %v603 = vpop.permute.xlu0 %602
        %606 = vset.pattern.permute.xlu0 0
        %607 = vperm.xlu0 %606, %v573
        %v608 = vpop.permute.xlu0 %607
        %611 = vset.pattern.permute.xlu0 0
        %612 = vperm.xlu0 %611, %v574
        %v613 = vpop.permute.xlu0 %612
        %v615 = vsub.f32 %v551, %v578
        %v616 = vsub.f32 %v552, %v578
        %v617 = vsub.f32 %v553, %v583
        %v618 = vsub.f32 %v554, %v583
        %v619 = vsub.f32 %v555, %v588
        %v620 = vsub.f32 %v556, %v588
        %v621 = vsub.f32 %v557, %v593
        %v622 = vsub.f32 %v558, %v593
        %v623 = vsub.f32 %v559, %v598
        %v624 = vsub.f32 %v560, %v598
        %v625 = vsub.f32 %v561, %v603
        %v626 = vsub.f32 %v562, %v603
        %v627 = vsub.f32 %v563, %v608
        %v628 = vsub.f32 %v564, %v608
        %v629 = vsub.f32 %v565, %v613
        %v630 = vsub.f32 %v566, %v613
        %v631 = vld [vmem:[%s476] sm:$0xff]
        %v632 = vld [vmem:[%s476 + $0x8] sm:$0xff]
        %v633 = vld [vmem:[%s476 + $0x10] sm:$0xff]
        %v634 = vld [vmem:[%s476 + $0x18] sm:$0xff]
        %v635 = vld [vmem:[%s476 + $0x20] sm:$0xff]
        %v636 = vld [vmem:[%s476 + $0x28] sm:$0xff]
        %v637 = vld [vmem:[%s476 + $0x30] sm:$0xff]
        %v638 = vld [vmem:[%s476 + $0x38] sm:$0xff]
        %640 = vset.pattern.permute.xlu0 0
        %641 = vperm.xlu0 %640, %v631
        %v642 = vpop.permute.xlu0 %641
        %645 = vset.pattern.permute.xlu0 0
        %646 = vperm.xlu0 %645, %v632
        %v647 = vpop.permute.xlu0 %646
        %650 = vset.pattern.permute.xlu0 0
        %651 = vperm.xlu0 %650, %v633
        %v652 = vpop.permute.xlu0 %651
        %655 = vset.pattern.permute.xlu0 0
        %656 = vperm.xlu0 %655, %v634
        %v657 = vpop.permute.xlu0 %656
        %660 = vset.pattern.permute.xlu0 0
        %661 = vperm.xlu0 %660, %v635
        %v662 = vpop.permute.xlu0 %661
        %665 = vset.pattern.permute.xlu0 0
        %666 = vperm.xlu0 %665, %v636
        %v667 = vpop.permute.xlu0 %666
        %670 = vset.pattern.permute.xlu0 0
        %671 = vperm.xlu0 %670, %v637
        %v672 = vpop.permute.xlu0 %671
        %675 = vset.pattern.permute.xlu0 0
        %676 = vperm.xlu0 %675, %v638
        %v677 = vpop.permute.xlu0 %676
        %v679 = vmul.f32 %v615, %v642
        %v680 = vmul.f32 %v616, %v642
        %v681 = vmul.f32 %v617, %v647
        %v682 = vmul.f32 %v618, %v647
        %v683 = vmul.f32 %v619, %v652
        %v684 = vmul.f32 %v620, %v652
        %v685 = vmul.f32 %v621, %v657
        %v686 = vmul.f32 %v622, %v657
        %v687 = vmul.f32 %v623, %v662
        %v688 = vmul.f32 %v624, %v662
        %v689 = vmul.f32 %v625, %v667
        %v690 = vmul.f32 %v626, %v667
        %v691 = vmul.f32 %v627, %v672
        %v692 = vmul.f32 %v628, %v672
        %v693 = vmul.f32 %v629, %v677
        %v694 = vmul.f32 %v630, %v677
        %v695 = vld [vmem:[%s481] sm:$0x3]
        %v697 = vlaneseq
        %v698 = vshrl.u32 %v697, 7
        %v699 = vsub.s32 0, %v698
        %v700 = vrot.slane %v695, %v699
        %v701 = vlaneseq
        %v702 = vshrl.u32 %v701, 7
        %v703 = vsub.s32 1, %v702
        %v704 = vrot.slane %v695, %v703
        %v707 = vmul.f32 %v679, %v700
        %v708 = vmul.f32 %v680, %v704
        %v709 = vmul.f32 %v681, %v700
        %v710 = vmul.f32 %v682, %v704
        %v711 = vmul.f32 %v683, %v700
        %v712 = vmul.f32 %v684, %v704
        %v713 = vmul.f32 %v685, %v700
        %v714 = vmul.f32 %v686, %v704
        %v715 = vmul.f32 %v687, %v700
        %v716 = vmul.f32 %v688, %v704
        %v717 = vmul.f32 %v689, %v700
        %v718 = vmul.f32 %v690, %v704
        %v719 = vmul.f32 %v691, %v700
        %v720 = vmul.f32 %v692, %v704
        %v721 = vmul.f32 %v693, %v700
        %v722 = vmul.f32 %v694, %v704
        %v723 = vld [vmem:[%s486] sm:$0x3]
        %v725 = vlaneseq
        %v726 = vshrl.u32 %v725, 7
        %v727 = vsub.s32 0, %v726
        %v728 = vrot.slane %v723, %v727
        %v729 = vlaneseq
        %v730 = vshrl.u32 %v729, 7
        %v731 = vsub.s32 1, %v730
        %v732 = vrot.slane %v723, %v731
        %v735 = vadd.f32 %v707, %v728
        %v736 = vadd.f32 %v708, %v732
        %v737 = vadd.f32 %v709, %v728
        %v738 = vadd.f32 %v710, %v732
        %v739 = vadd.f32 %v711, %v728
        %v740 = vadd.f32 %v712, %v732
        %v741 = vadd.f32 %v713, %v728
        %v742 = vadd.f32 %v714, %v732
        %v743 = vadd.f32 %v715, %v728
        %v744 = vadd.f32 %v716, %v732
        %v745 = vadd.f32 %v717, %v728
        %v746 = vadd.f32 %v718, %v732
        %v747 = vadd.f32 %v719, %v728
        %v748 = vadd.f32 %v720, %v732
        %v749 = vadd.f32 %v721, %v728
        %v750 = vadd.f32 %v722, %v732
        %v751 = vld [vmem:[%s465] sm:$0xff]
        %v752 = vld [vmem:[%s465 + $0x8] sm:$0xff]
        %v753 = vld [vmem:[%s465 + $0x10] sm:$0xff]
        %v754 = vld [vmem:[%s465 + $0x18] sm:$0xff]
        %v755 = vld [vmem:[%s465 + $0x20] sm:$0xff]
        %v756 = vld [vmem:[%s465 + $0x28] sm:$0xff]
        %v757 = vld [vmem:[%s465 + $0x30] sm:$0xff]
        %v758 = vld [vmem:[%s465 + $0x38] sm:$0xff]
        %v759 = vld [vmem:[%s465 + $0x40] sm:$0xff]
        %v760 = vld [vmem:[%s465 + $0x48] sm:$0xff]
        %v761 = vld [vmem:[%s465 + $0x50] sm:$0xff]
        %v762 = vld [vmem:[%s465 + $0x58] sm:$0xff]
        %v763 = vld [vmem:[%s465 + $0x60] sm:$0xff]
        %v764 = vld [vmem:[%s465 + $0x68] sm:$0xff]
        %v765 = vld [vmem:[%s465 + $0x70] sm:$0xff]
        %v766 = vld [vmem:[%s465 + $0x78] sm:$0xff]
        %v767 = vpack.c.bf16 %v737, %v735
        %v768 = vpack.c.bf16 %v738, %v736
        %v769 = vpack.c.bf16 %v741, %v739
        %v770 = vpack.c.bf16 %v742, %v740
        %v771 = vpack.c.bf16 %v745, %v743
        %v772 = vpack.c.bf16 %v746, %v744
        %v773 = vpack.c.bf16 %v749, %v747
        %v774 = vpack.c.bf16 %v750, %v748
        %v775 = vld [vmem:[%s509] sm:$0xff]
        %v776 = vld [vmem:[%s509 + $0x8] sm:$0xff]
        %v777 = vld [vmem:[%s509 + $0x10] sm:$0xff]
        %v778 = vld [vmem:[%s509 + $0x18] sm:$0xff]
        %v779 = vld [vmem:[%s509 + $0x20] sm:$0xff]
        %v780 = vld [vmem:[%s509 + $0x28] sm:$0xff]
        %v781 = vld [vmem:[%s509 + $0x30] sm:$0xff]
        %v782 = vld [vmem:[%s509 + $0x38] sm:$0xff]
        %v783 = vld [vmem:[%s509 + $0x40] sm:$0xff]
        %v784 = vld [vmem:[%s509 + $0x48] sm:$0xff]
        %v785 = vld [vmem:[%s509 + $0x50] sm:$0xff]
        %v786 = vld [vmem:[%s509 + $0x58] sm:$0xff]
        %v787 = vld [vmem:[%s509 + $0x60] sm:$0xff]
        %v788 = vld [vmem:[%s509 + $0x68] sm:$0xff]
        %v789 = vld [vmem:[%s509 + $0x70] sm:$0xff]
        %v790 = vld [vmem:[%s509 + $0x78] sm:$0xff]
        %v791 = vld [vmem:[%s509 + $0x80] sm:$0xff]
        %v792 = vld [vmem:[%s509 + $0x88] sm:$0xff]
        %v793 = vld [vmem:[%s509 + $0x90] sm:$0xff]
        %v794 = vld [vmem:[%s509 + $0x98] sm:$0xff]
        %v795 = vld [vmem:[%s509 + $0xa0] sm:$0xff]
        %v796 = vld [vmem:[%s509 + $0xa8] sm:$0xff]
        %v797 = vld [vmem:[%s509 + $0xb0] sm:$0xff]
        %v798 = vld [vmem:[%s509 + $0xb8] sm:$0xff]
        %v799 = vld [vmem:[%s509 + $0xc0] sm:$0xff]
        %v800 = vld [vmem:[%s509 + $0xc8] sm:$0xff]
        %v801 = vld [vmem:[%s509 + $0xd0] sm:$0xff]
        %v802 = vld [vmem:[%s509 + $0xd8] sm:$0xff]
        %v803 = vld [vmem:[%s509 + $0xe0] sm:$0xff]
        %v804 = vld [vmem:[%s509 + $0xe8] sm:$0xff]
        %v805 = vld [vmem:[%s509 + $0xf0] sm:$0xff]
        %v806 = vld [vmem:[%s509 + $0xf8] sm:$0xff]
        %v839 = vunpack.c.l.b16 %v775
        %v840 = vunpack.c.h.b16 %v775
        %v841 = vunpack.c.l.b16 %v776
        %v842 = vunpack.c.h.b16 %v776
        %v843 = vunpack.c.l.b16 %v777
        %v844 = vunpack.c.h.b16 %v777
        %v845 = vunpack.c.l.b16 %v778
        %v846 = vunpack.c.h.b16 %v778
        %v847 = vunpack.c.l.b16 %v779
        %v848 = vunpack.c.h.b16 %v779
        %v849 = vunpack.c.l.b16 %v780
        %v850 = vunpack.c.h.b16 %v780
        %v851 = vunpack.c.l.b16 %v781
        %v852 = vunpack.c.h.b16 %v781
        %v853 = vunpack.c.l.b16 %v782
        %v854 = vunpack.c.h.b16 %v782
        %v855 = vunpack.c.l.b16 %v783
        %v856 = vunpack.c.h.b16 %v783
        %v857 = vunpack.c.l.b16 %v784
        %v858 = vunpack.c.h.b16 %v784
        %v859 = vunpack.c.l.b16 %v785
        %v860 = vunpack.c.h.b16 %v785
        %v861 = vunpack.c.l.b16 %v786
        %v862 = vunpack.c.h.b16 %v786
        %v863 = vunpack.c.l.b16 %v787
        %v864 = vunpack.c.h.b16 %v787
        %v865 = vunpack.c.l.b16 %v788
        %v866 = vunpack.c.h.b16 %v788
        %v867 = vunpack.c.l.b16 %v789
        %v868 = vunpack.c.h.b16 %v789
        %v869 = vunpack.c.l.b16 %v790
        %v870 = vunpack.c.h.b16 %v790
        %v871 = vunpack.c.l.b16 %v791
        %v872 = vunpack.c.h.b16 %v791
        %v873 = vunpack.c.l.b16 %v792
        %v874 = vunpack.c.h.b16 %v792
        %v875 = vunpack.c.l.b16 %v793
        %v876 = vunpack.c.h.b16 %v793
        %v877 = vunpack.c.l.b16 %v794
        %v878 = vunpack.c.h.b16 %v794
        %v879 = vunpack.c.l.b16 %v795
        %v880 = vunpack.c.h.b16 %v795
        %v881 = vunpack.c.l.b16 %v796
        %v882 = vunpack.c.h.b16 %v796
        %v883 = vunpack.c.l.b16 %v797
        %v884 = vunpack.c.h.b16 %v797
        %v885 = vunpack.c.l.b16 %v798
        %v886 = vunpack.c.h.b16 %v798
        %v887 = vunpack.c.l.b16 %v799
        %v888 = vunpack.c.h.b16 %v799
        %v889 = vunpack.c.l.b16 %v800
        %v890 = vunpack.c.h.b16 %v800
        %v891 = vunpack.c.l.b16 %v801
        %v892 = vunpack.c.h.b16 %v801
        %v893 = vunpack.c.l.b16 %v802
        %v894 = vunpack.c.h.b16 %v802
        %v895 = vunpack.c.l.b16 %v803
        %v896 = vunpack.c.h.b16 %v803
        %v897 = vunpack.c.l.b16 %v804
        %v898 = vunpack.c.h.b16 %v804
        %v899 = vunpack.c.l.b16 %v805
        %v900 = vunpack.c.h.b16 %v805
        %v901 = vunpack.c.l.b16 %v806
        %v902 = vunpack.c.h.b16 %v806
        %v903 = vpack.c.b16 %v841, %v839
        %v904 = vpack.c.b16 %v842, %v840
        %v905 = vpack.c.b16 %v845, %v843
        %v906 = vpack.c.b16 %v846, %v844
        %v907 = vpack.c.b16 %v849, %v847
        %v908 = vpack.c.b16 %v850, %v848
        %v909 = vpack.c.b16 %v853, %v851
        %v910 = vpack.c.b16 %v854, %v852
        %v911 = vpack.c.b16 %v857, %v855
        %v912 = vpack.c.b16 %v858, %v856
        %v913 = vpack.c.b16 %v861, %v859
        %v914 = vpack.c.b16 %v862, %v860
        %v915 = vpack.c.b16 %v865, %v863
        %v916 = vpack.c.b16 %v866, %v864
        %v917 = vpack.c.b16 %v869, %v867
        %v918 = vpack.c.b16 %v870, %v868
        %v919 = vpack.c.b16 %v873, %v871
        %v920 = vpack.c.b16 %v874, %v872
        %v921 = vpack.c.b16 %v877, %v875
        %v922 = vpack.c.b16 %v878, %v876
        %v923 = vpack.c.b16 %v881, %v879
        %v924 = vpack.c.b16 %v882, %v880
        %v925 = vpack.c.b16 %v885, %v883
        %v926 = vpack.c.b16 %v886, %v884
        %v927 = vpack.c.b16 %v889, %v887
        %v928 = vpack.c.b16 %v890, %v888
        %v929 = vpack.c.b16 %v893, %v891
        %v930 = vpack.c.b16 %v894, %v892
        %v931 = vpack.c.b16 %v897, %v895
        %v932 = vpack.c.b16 %v898, %v896
        %v933 = vpack.c.b16 %v901, %v899
        %v934 = vpack.c.b16 %v902, %v900
        %967 = vmatprep.subr.bf16.mxu0 %v918
        %968 = vmatpush1.bf16.msra.mxu0 %v917
        %969 = vmatprep.subr.bf16.mxu0 %v916
        %970 = vmatpush1.bf16.msra.mxu0 %v915
        %971 = vmatprep.subr.bf16.mxu0 %v914
        %972 = vmatpush1.bf16.msra.mxu0 %v913
        %973 = vmatprep.subr.bf16.mxu0 %v912
        %974 = vmatpush1.bf16.msra.mxu0 %v911
        %975 = vmatprep.subr.bf16.mxu0 %v910
        %976 = vmatpush1.bf16.msra.mxu0 %v909
        %977 = vmatprep.subr.bf16.mxu0 %v908
        %978 = vmatpush1.bf16.msra.mxu0 %v907
        %979 = vmatprep.subr.bf16.mxu0 %v906
        %980 = vmatpush1.bf16.msra.mxu0 %v905
        %981 = vmatprep.subr.bf16.mxu0 %v904
        %982 = vmatpush1.bf16.msra.mxu0 %v903
        %983 = vmatprep.subr.bf16.mxu0 %v934
        %984 = vmatpush2.bf16.msra.mxu0 %v933
        %985 = vmatprep.subr.bf16.mxu0 %v932
        %986 = vmatpush2.bf16.msra.mxu0 %v931
        %987 = vmatprep.subr.bf16.mxu0 %v930
        %988 = vmatpush2.bf16.msra.mxu0 %v929
        %989 = vmatprep.subr.bf16.mxu0 %v928
        %990 = vmatpush2.bf16.msra.mxu0 %v927
        %991 = vmatprep.subr.bf16.mxu0 %v926
        %992 = vmatpush2.bf16.msra.mxu0 %v925
        %993 = vmatprep.subr.bf16.mxu0 %v924
        %994 = vmatpush2.bf16.msra.mxu0 %v923
        %995 = vmatprep.subr.bf16.mxu0 %v922
        %996 = vmatpush2.bf16.msra.mxu0 %v921
        %997 = vmatprep.subr.bf16.mxu0 %v920
        %998 = vmatpush2.bf16.msra.mxu0 %v919
        %999 = vmatprep.mubr.bf16.mxu0 %v768
        %1000 = vmatmul.mubr.bf16.gmra.mxu0 %v767
        %v1001 = vpop.f32.mrf.mxu0
        %v1002 = vadd.f32 0.0, %v1001
        %v1003 = vpop.f32.mrf.mxu0
        %v1004 = vadd.f32 0.0, %v1003
        %v1005 = vpop.f32.mrf.mxu0
        %v1006 = vadd.f32 0.0, %v1005
        %v1007 = vpop.f32.mrf.mxu0
        %v1008 = vadd.f32 0.0, %v1007
        %1009 = vmatprep.mubr.bf16.mxu0 %v770
        %1010 = vmatmul.mubr.bf16.gmra.mxu0 %v769
        %v1011 = vpop.f32.mrf.mxu0
        %v1012 = vadd.f32 0.0, %v1011
        %v1013 = vpop.f32.mrf.mxu0
        %v1014 = vadd.f32 0.0, %v1013
        %v1015 = vpop.f32.mrf.mxu0
        %v1016 = vadd.f32 0.0, %v1015
        %v1017 = vpop.f32.mrf.mxu0
        %v1018 = vadd.f32 0.0, %v1017
        %1019 = vmatprep.mubr.bf16.mxu0 %v772
        %1020 = vmatmul.mubr.bf16.gmra.mxu0 %v771
        %v1021 = vpop.f32.mrf.mxu0
        %v1022 = vadd.f32 0.0, %v1021
        %v1023 = vpop.f32.mrf.mxu0
        %v1024 = vadd.f32 0.0, %v1023
        %v1025 = vpop.f32.mrf.mxu0
        %v1026 = vadd.f32 0.0, %v1025
        %v1027 = vpop.f32.mrf.mxu0
        %v1028 = vadd.f32 0.0, %v1027
        %1029 = vmatprep.mubr.bf16.mxu0 %v774
        %1030 = vmatmul.mubr.bf16.gmra.mxu0 %v773
        %v1031 = vpop.f32.mrf.mxu0
        %v1032 = vadd.f32 0.0, %v1031
        %v1033 = vpop.f32.mrf.mxu0
        %v1034 = vadd.f32 0.0, %v1033
        %v1035 = vpop.f32.mrf.mxu0
        %v1036 = vadd.f32 0.0, %v1035
        %v1037 = vpop.f32.mrf.mxu0
        %v1038 = vadd.f32 0.0, %v1037
        %1039 = vdwg.mxu0
        %v1040 = vadd.f32 %v751, %v1002
        %v1041 = vadd.f32 %v752, %v1004
        %v1042 = vadd.f32 %v753, %v1006
        %v1043 = vadd.f32 %v754, %v1008
        %v1044 = vadd.f32 %v755, %v1012
        %v1045 = vadd.f32 %v756, %v1014
        %v1046 = vadd.f32 %v757, %v1016
        %v1047 = vadd.f32 %v758, %v1018
        %v1048 = vadd.f32 %v759, %v1022
        %v1049 = vadd.f32 %v760, %v1024
        %v1050 = vadd.f32 %v761, %v1026
        %v1051 = vadd.f32 %v762, %v1028
        %v1052 = vadd.f32 %v763, %v1032
        %v1053 = vadd.f32 %v764, %v1034
        %v1054 = vadd.f32 %v765, %v1036
        %v1055 = vadd.f32 %v766, %v1038
        %1056 = vst [vmem:[%s465] sm:$0xff] %v1040
        %1057 = vst [vmem:[%s465 + $0x8] sm:$0xff] %v1041
        %1058 = vst [vmem:[%s465 + $0x10] sm:$0xff] %v1042
        %1059 = vst [vmem:[%s465 + $0x18] sm:$0xff] %v1043
        %1060 = vst [vmem:[%s465 + $0x20] sm:$0xff] %v1044
        %1061 = vst [vmem:[%s465 + $0x28] sm:$0xff] %v1045
        %1062 = vst [vmem:[%s465 + $0x30] sm:$0xff] %v1046
        %1063 = vst [vmem:[%s465 + $0x38] sm:$0xff] %v1047
        %1064 = vst [vmem:[%s465 + $0x40] sm:$0xff] %v1048
        %1065 = vst [vmem:[%s465 + $0x48] sm:$0xff] %v1049
        %1066 = vst [vmem:[%s465 + $0x50] sm:$0xff] %v1050
        %1067 = vst [vmem:[%s465 + $0x58] sm:$0xff] %v1051
        %1068 = vst [vmem:[%s465 + $0x60] sm:$0xff] %v1052
        %1069 = vst [vmem:[%s465 + $0x68] sm:$0xff] %v1053
        %1070 = vst [vmem:[%s465 + $0x70] sm:$0xff] %v1054
        %1071 = vst [vmem:[%s465 + $0x78] sm:$0xff] %v1055
        // Predicated region
        $region57: #{sublayer_connection_linear.3} parent=51 // pred_check
          %p1072 = pneg %p531
        $region58: #{sublayer_connection_linear.3} parent=51 // pred_check_branch
          %1074 = sbr.rel (%p1072) target = $region60
        $region59: #{sublayer_connection_linear.3} parent=51 // pred_region
          %v1075 = vld [vmem:[%s465] sm:$0xff]
          %v1076 = vld [vmem:[%s465 + $0x8] sm:$0xff]
          %v1077 = vld [vmem:[%s465 + $0x10] sm:$0xff]
          %v1078 = vld [vmem:[%s465 + $0x18] sm:$0xff]
          %v1079 = vld [vmem:[%s465 + $0x20] sm:$0xff]
          %v1080 = vld [vmem:[%s465 + $0x28] sm:$0xff]
          %v1081 = vld [vmem:[%s465 + $0x30] sm:$0xff]
          %v1082 = vld [vmem:[%s465 + $0x38] sm:$0xff]
          %v1083 = vld [vmem:[%s465 + $0x40] sm:$0xff]
          %v1084 = vld [vmem:[%s465 + $0x48] sm:$0xff]
          %v1085 = vld [vmem:[%s465 + $0x50] sm:$0xff]
          %v1086 = vld [vmem:[%s465 + $0x58] sm:$0xff]
          %v1087 = vld [vmem:[%s465 + $0x60] sm:$0xff]
          %v1088 = vld [vmem:[%s465 + $0x68] sm:$0xff]
          %v1089 = vld [vmem:[%s465 + $0x70] sm:$0xff]
          %v1090 = vld [vmem:[%s465 + $0x78] sm:$0xff]
          %v1091 = vld [vmem:[%s515] sm:$0x3]
          %v1093 = vlaneseq
          %v1094 = vshrl.u32 %v1093, 7
          %v1095 = vsub.s32 0, %v1094
          %v1096 = vrot.slane %v1091, %v1095
          %v1097 = vlaneseq
          %v1098 = vshrl.u32 %v1097, 7
          %v1099 = vsub.s32 1, %v1098
          %v1100 = vrot.slane %v1091, %v1099
          %v1103 = vadd.f32 %v1075, %v1096
          %v1104 = vadd.f32 %v1076, %v1100
          %v1105 = vadd.f32 %v1077, %v1096
          %v1106 = vadd.f32 %v1078, %v1100
          %v1107 = vadd.f32 %v1079, %v1096
          %v1108 = vadd.f32 %v1080, %v1100
          %v1109 = vadd.f32 %v1081, %v1096
          %v1110 = vadd.f32 %v1082, %v1100
          %v1111 = vadd.f32 %v1083, %v1096
          %v1112 = vadd.f32 %v1084, %v1100
          %v1113 = vadd.f32 %v1085, %v1096
          %v1114 = vadd.f32 %v1086, %v1100
          %v1115 = vadd.f32 %v1087, %v1096
          %v1116 = vadd.f32 %v1088, %v1100
          %v1117 = vadd.f32 %v1089, %v1096
          %v1118 = vadd.f32 %v1090, %v1100
          %v1119 = vld [vmem:[%s526] sm:$0xff]
          %v1120 = vld [vmem:[%s526 + $0x8] sm:$0xff]
          %v1121 = vld [vmem:[%s526 + $0x10] sm:$0xff]
          %v1122 = vld [vmem:[%s526 + $0x18] sm:$0xff]
          %v1123 = vld [vmem:[%s526 + $0x20] sm:$0xff]
          %v1124 = vld [vmem:[%s526 + $0x28] sm:$0xff]
          %v1125 = vld [vmem:[%s526 + $0x30] sm:$0xff]
          %v1126 = vld [vmem:[%s526 + $0x38] sm:$0xff]
          %v1127 = vld [vmem:[%s526 + $0x40] sm:$0xff]
          %v1128 = vld [vmem:[%s526 + $0x48] sm:$0xff]
          %v1129 = vld [vmem:[%s526 + $0x50] sm:$0xff]
          %v1130 = vld [vmem:[%s526 + $0x58] sm:$0xff]
          %v1131 = vld [vmem:[%s526 + $0x60] sm:$0xff]
          %v1132 = vld [vmem:[%s526 + $0x68] sm:$0xff]
          %v1133 = vld [vmem:[%s526 + $0x70] sm:$0xff]
          %v1134 = vld [vmem:[%s526 + $0x78] sm:$0xff]
          %v1135 = vadd.f32 %v1103, %v1119
          %v1136 = vadd.f32 %v1104, %v1120
          %v1137 = vadd.f32 %v1105, %v1121
          %v1138 = vadd.f32 %v1106, %v1122
          %v1139 = vadd.f32 %v1107, %v1123
          %v1140 = vadd.f32 %v1108, %v1124
          %v1141 = vadd.f32 %v1109, %v1125
          %v1142 = vadd.f32 %v1110, %v1126
          %v1143 = vadd.f32 %v1111, %v1127
          %v1144 = vadd.f32 %v1112, %v1128
          %v1145 = vadd.f32 %v1113, %v1129
          %v1146 = vadd.f32 %v1114, %v1130
          %v1147 = vadd.f32 %v1115, %v1131
          %v1148 = vadd.f32 %v1116, %v1132
          %v1149 = vadd.f32 %v1117, %v1133
          %v1150 = vadd.f32 %v1118, %v1134
          %1151 = vst [vmem:[%s465] sm:$0xff] %v1135
          %1152 = vst [vmem:[%s465 + $0x8] sm:$0xff] %v1136
          %1153 = vst [vmem:[%s465 + $0x10] sm:$0xff] %v1137
          %1154 = vst [vmem:[%s465 + $0x18] sm:$0xff] %v1138
          %1155 = vst [vmem:[%s465 + $0x20] sm:$0xff] %v1139
          %1156 = vst [vmem:[%s465 + $0x28] sm:$0xff] %v1140
          %1157 = vst [vmem:[%s465 + $0x30] sm:$0xff] %v1141
          %1158 = vst [vmem:[%s465 + $0x38] sm:$0xff] %v1142
          %1159 = vst [vmem:[%s465 + $0x40] sm:$0xff] %v1143
          %1160 = vst [vmem:[%s465 + $0x48] sm:$0xff] %v1144
          %1161 = vst [vmem:[%s465 + $0x50] sm:$0xff] %v1145
          %1162 = vst [vmem:[%s465 + $0x58] sm:$0xff] %v1146
          %1163 = vst [vmem:[%s465 + $0x60] sm:$0xff] %v1147
          %1164 = vst [vmem:[%s465 + $0x68] sm:$0xff] %v1148
          %1165 = vst [vmem:[%s465 + $0x70] sm:$0xff] %v1149
          %1166 = vst [vmem:[%s465 + $0x78] sm:$0xff] %v1150
        $region60: #{sublayer_connection_linear.3} parent=51 // pred_fallthru
          _
        %s1167 = sand.u32 %s265, 1
        %s1168 = scalar_lea.sflag [#allocation3], %s1167
        %s1169 = sand.u32 %s265, 1
        %s1170 = smul.addr %s1169, 128
        %s1171 = scalar_lea.vmem [#allocation2], %s1170
        // Predicated region
        $region61: #{sublayer_connection_linear.3} parent=51 // pred_check
          %p1172 = pneg %p275
        $region62: #{sublayer_connection_linear.3} parent=51 // pred_check_branch
          %1174 = sbr.rel (%p1172) target = $region64
        $region63: #{sublayer_connection_linear.3} parent=51 // pred_region
          %s1175 = smul.u32 8, %s27
          %s1176 = smul.u32 2, %s28
          %s1178 = ssub.s32 2048, 2048
          %1179 = vsyncadd %s1168, %s1178
          %s1180 = smul.addr %s1175, 2
          %s1181 = sadd.s32 %s1176, %s1180
          %s1182 = smul.addr %s1181, 128
          %s1183 = scalar_lea.hbm %s8, %s1182
          %s1184 = sshll.u32 %s1171, 4
          %s1185 = int_to_ptr.vmem [resolvable:$true] %s1184
          %1190 = dma.vmem_to_hbm [thread:$0]  %s1185, 2048, %s1183, %s1168, 256, 256, 16
        $region64: #{sublayer_connection_linear.3} parent=51 // pred_fallthru
          _
      $region52: #{sublayer_connection_linear.3} parent=5 // pred_fallthru
        _
      %p1191 = scmp.le.s32.totalorder 2, %s17
      // Predicated region
      $region65: #{sublayer_connection_linear.3} parent=5 // pred_check
        %p1192 = pneg %p1191
      $region66: #{sublayer_connection_linear.3} parent=5 // pred_check_branch
        %1194 = sbr.rel (%p1192) target = $region68
      $region67: #{sublayer_connection_linear.3} parent=5 // pred_region
        %s1195 = ssub.s32 %s17, 2
        // Predicated region
        $region69: #{sublayer_connection_linear.3} parent=67 // pred_check
          %p1196 = pneg %p281
        $region70: #{sublayer_connection_linear.3} parent=67 // pred_check_branch
          %1198 = sbr.rel (%p1196) target = $region72
        $region71: #{sublayer_connection_linear.3} parent=67 // pred_region
          %s1199 = sand.u32 %s266, 1
          %s1200 = scalar_lea.sflag [#allocation3], %s1199
          %s1201 = sand.u32 %s266, 1
          %s1202 = smul.addr %s1201, 128
          %s1203 = scalar_lea.vmem [#allocation2], %s1202
          %1204 = dma.done %s1200, 2048
        $region72: #{sublayer_connection_linear.3} parent=67 // pred_fallthru
          _
      $region68: #{sublayer_connection_linear.3} parent=5 // pred_fallthru
        _
    $region6: #{sublayer_connection_linear.3} parent=1 // loop_footer
      %s21 = sadd.s32 1, %s17
    $region7: #{sublayer_connection_linear.3} parent=1 // loop_footer_branch
      %16 = sbr.rel target = $region3
    $region8: #{sublayer_connection_linear.3} parent=1 // loop_exit
      _
    %1205 = vsyncpa [#allocation3], 1
    %s1206 = scalar_lea.sflag [#allocation3], 1
    %1207 = vsyncpa %s1206, 1

</llo_original>
